<compile_context>
chip_gen: v7x
topology: tpu7x:2x2x1
jax: 0.10.0
libtpu: 0.0.40
codegen_flags: <defaults>
</compile_context>

<pallas_src>
import math
import jax
import jax.numpy as jnp
from jax.experimental import pallas as pl

# ----------------------------- small config ---------------------------------
BS = 2                      # batch
C = 32                      # im_feat_dim (channels of image features)
IMG_HW = 4                  # spatial -> n_feats = 16
N_FEATS = IMG_HW * IMG_HW
H = 32                      # h_dim
M = 16                      # m_dim
DESC = 24                   # desc_dim
NC = 8                      # num_classes
S = 1                       # s_dim
A = 16                      # attn_dim
H2 = math.ceil(H / 2)       # 16

# ---- packed K=32 weight slab column layout (wk32: (32, 145)) ----------------
COL_AWW = 0                  # aww   : (H, A)      cols [0, 16)
COL_AWX = COL_AWW + A        # awx   : (C, A)      cols [16, 32)
COL_IMW = COL_AWX + A        # imw   : (C, H)      cols [32, 64)
COL_HC = COL_IMW + H         # v1w|sw|whw : (H,49) cols [64, 113)
COL_WD = COL_HC + H2 + S + H # wdw   : (H, H)      cols [113, 145)
N_K32 = COL_WD + H           # 145

# ---- packed bias row layout (bias_pack: (1, 195)) ---------------------------
OFF_BATTN = 0                         # awwb + awxb        width A
OFF_AU = OFF_BATTN + A                # au^T               width A
OFF_AUB = OFF_AU + A                  # aub                width 1
OFF_IMB = OFF_AUB + 1                 # imb                width H
OFF_CB = OFF_IMB + H                  # cb                 width H
OFF_TB = OFF_CB + H                   # tb                 width H
OFF_BHC = OFF_TB + H                  # v1b|sb|whb         width H2+S+H
OFF_BOUT = OFF_BHC + H2 + S + H       # v2b|wmb            width 1+M
N_BIAS = OFF_BOUT + 1 + M             # 195

# ---- packed output lane layout (out: (BS, 128)) -----------------------------
O_SBIN = 0
O_SPROB = O_SBIN + S
O_WBIN = O_SPROB + S
O_WPROB = O_WBIN + M
O_Y = O_WPROB + M
O_R = O_Y + NC
PACKED = O_R + 1             # 43
OUT_W = 128


# ------------------------------- kernel --------------------------------------
def agent_kernel(x_ref, mh_ref, desc_ref,
                 wgru_ref, bgru_ref, wk32_ref, wcw_ref, wtw_ref, wout_ref,
                 bias_ref, out_ref):
    f32 = jnp.float32

    # ---- MessageProcessor: GRUCell(m, h_prev) -------------------------------
    mh = mh_ref[...]                                   # (BS, M+H)
    m = mh[:, :M]
    h_prev = mh[:, M:]
    gi = jnp.dot(m, wgru_ref[:M, :], preferred_element_type=f32) + bgru_ref[0:1, :]
    gh = jnp.dot(h_prev, wgru_ref[M:, :], preferred_element_type=f32)
    gbh = bgru_ref[1:2, :]
    r_g = jax.nn.sigmoid(gi[:, :H] + gh[:, :H] + gbh[:, :H])
    z_g = jax.nn.sigmoid(gi[:, H:2 * H] + gh[:, H:2 * H] + gbh[:, H:2 * H])
    n_g = jnp.tanh(gi[:, 2 * H:] + r_g * (gh[:, 2 * H:] + gbh[:, 2 * H:]))
    h_z = (1.0 - z_g) * n_g + z_g * h_prev             # (BS, H)

    # ---- ImageProcessor with attention (t != 0 -> softmax weights) ----------
    x3 = x_ref[...]                                    # (BS, N_FEATS, C)
    x_flat = x3.reshape(BS * N_FEATS, C)
    h_w = jnp.dot(h_z, wk32_ref[:, COL_AWW:COL_AWW + A],
                  preferred_element_type=f32)          # (BS, A)
    h_x = jnp.dot(x_flat, wk32_ref[:, COL_AWX:COL_AWX + A],
                  preferred_element_type=f32)          # (BS*N_FEATS, A)
    b_attn = bias_ref[:, OFF_BATTN:OFF_BATTN + A]      # (1, A): awwb + awxb
    u_in = jnp.tanh(h_w[:, None, :] + h_x.reshape(BS, N_FEATS, A) + b_attn)
    au_row = bias_ref[:, OFF_AU:OFF_AU + A]            # (1, A) == au^T
    aub = bias_ref[:, OFF_AUB:OFF_AUB + 1]             # (1, 1)
    scores = jnp.sum(u_in * au_row, axis=-1) + aub     # (BS, N_FEATS), lane layout
    scores = scores - jnp.max(scores, axis=1, keepdims=True)
    e = jnp.exp(scores)
    attn = e / jnp.sum(e, axis=1, keepdims=True)       # (BS, N_FEATS)
    x_attn = jnp.sum(attn[:, :, None] * x3, axis=1)    # (BS, C)
    h_i = jax.nn.relu(
        jnp.dot(x_attn, wk32_ref[:, COL_IMW:COL_IMW + H],
                preferred_element_type=f32)
        + bias_ref[:, OFF_IMB:OFF_IMB + H])            # (BS, H)

    # ---- text_im_combine(cat([h_z, h_i])) -----------------------------------
    hz_hi = jnp.concatenate([h_z, h_i], axis=1)        # (BS, 2H)
    h_c = (jnp.dot(hz_hi, wcw_ref[...], preferred_element_type=f32)
           + bias_ref[:, OFF_CB:OFF_CB + H])           # (BS, H)

    # ---- TextProcessor -------------------------------------------------------
    desc_flat = desc_ref[...].reshape(BS * NC, DESC)
    desc_proc = jax.nn.relu(
        jnp.dot(desc_flat, wtw_ref[...], preferred_element_type=f32)
        + bias_ref[:, OFF_TB:OFF_TB + H])              # (BS*NC, H)
    desc_proc3 = desc_proc.reshape(BS, NC, H)

    # ---- fused h_c heads: [v1w | sw | whw] in one dot ------------------------
    hc_all = (jnp.dot(h_c, wk32_ref[:, COL_HC:COL_HC + H2 + S + H],
                      preferred_element_type=f32)
              + bias_ref[:, OFF_BHC:OFF_BHC + H2 + S + H])   # (BS, 49)
    hr = jax.nn.relu(hc_all[:, :H2])                   # RewardEstimator hidden
    s_prob = jax.nn.sigmoid(hc_all[:, H2:H2 + S])      # STOP prob
    whc = hc_all[:, H2 + S:]                           # h_c @ whw + whb

    # ---- predict_classes (use_MLP=False): y[b,c] = <desc_proc[b,c], h_c[b]> --
    y = jnp.sum(desc_proc3 * h_c[:, None, :], axis=-1)       # (BS, NC)
    ym = y - jnp.max(y, axis=1, keepdims=True)
    ye = jnp.exp(ym)
    y_scores = ye / jnp.sum(ye, axis=1, keepdims=True)       # (BS, NC)

    # ---- MessageGenerator (use_binary=True, training=False -> round) --------
    desc_sum = jnp.sum(y_scores[:, :, None] * desc_proc3, axis=1)   # (BS, H)
    wd = jnp.dot(desc_sum, wk32_ref[:, COL_WD:COL_WD + H],
                 preferred_element_type=f32)                        # (BS, H)
    h_w_msg = jnp.tanh(whc + wd)

    # ---- fused final heads: [hr | h_w_msg] @ blockdiag(v2w, wmw) -------------
    lhs_out = jnp.concatenate([hr, h_w_msg], axis=1)                # (BS, H2+H)
    out2 = (jnp.dot(lhs_out, wout_ref[...], preferred_element_type=f32)
            + bias_ref[:, OFF_BOUT:OFF_BOUT + 1 + M])               # (BS, 1+M)
    r = out2[:, 0:1]
    w_probs = jax.nn.sigmoid(out2[:, 1:1 + M])
    w_bin = jnp.round(w_probs)
    s_bin = jnp.round(s_prob)

    # ---- single lane-dense packed output (BS, 128) ---------------------------
    pad = jnp.zeros((BS, OUT_W - PACKED), f32)
    out_ref[...] = jnp.concatenate([s_bin, s_prob, w_bin, w_probs, y, r, pad],
                                   axis=1)


# ------------------------------ parameters -----------------------------------
def make_params(key):
    def xavier(k, shape):
        std = math.sqrt(2.0 / (shape[0] + shape[1]))
        return (std * jax.random.normal(k, shape)).astype(jnp.float32)

    ks = iter(jax.random.split(key, 32))
    z = lambda *s: jnp.zeros(s, jnp.float32)
    p = {}
    # GRUCell (weights xavier, biases zero — matches reset_parameters_util)
    p['gwi'] = xavier(next(ks), (M, 3 * H)); p['gwh'] = xavier(next(ks), (H, 3 * H))
    p['gbi'] = z(1, 3 * H);                  p['gbh'] = z(1, 3 * H)
    # ImageProcessor attention + im_transform
    p['aww'] = xavier(next(ks), (H, A));     p['awwb'] = z(1, A)
    p['awx'] = xavier(next(ks), (C, A));     p['awxb'] = z(1, A)
    p['au'] = xavier(next(ks), (A, 1));      p['aub'] = z(1, 1)
    p['imw'] = xavier(next(ks), (C, H));     p['imb'] = z(1, H)
    # text_im_combine, TextProcessor
    p['cw'] = xavier(next(ks), (2 * H, H));  p['cb'] = z(1, H)
    p['tw'] = xavier(next(ks), (DESC, H));   p['tb'] = z(1, H)
    # RewardEstimator, stop bit
    p['v1w'] = xavier(next(ks), (H, H2));    p['v1b'] = z(1, H2)
    p['v2w'] = xavier(next(ks), (H2, 1));    p['v2b'] = z(1, 1)
    p['sw'] = xavier(next(ks), (H, S));      p['sb'] = z(1, S)
    # MessageGenerator (w_h has bias, w_d has none, w has bias)
    p['whw'] = xavier(next(ks), (H, H));     p['whb'] = z(1, H)
    p['wdw'] = xavier(next(ks), (H, H))
    p['wmw'] = xavier(next(ks), (H, M));     p['wmb'] = z(1, M)
    return p


def pack_params(p):
    """Pack 27 tiny parameter tensors into 7 slabs (done once, outside the kernel)."""
    f32 = jnp.float32
    w_gru = jnp.concatenate([p['gwi'], p['gwh']], axis=0)                 # (M+H, 3H)
    b_gru = jnp.concatenate([p['gbi'], p['gbh']], axis=0)                 # (2, 3H)
    w_k32 = jnp.concatenate([p['aww'], p['awx'], p['imw'],
                             p['v1w'], p['sw'], p['whw'], p['wdw']],
                            axis=1)                                        # (32, 145)
    w_cw = p['cw']                                                         # (64, 32)
    w_tw = p['tw']                                                         # (24, 32)
    w_out = jnp.concatenate([
        jnp.concatenate([p['v2w'], jnp.zeros((H2, M), f32)], axis=1),
        jnp.concatenate([jnp.zeros((H, 1), f32), p['wmw']], axis=1),
    ], axis=0)                                                             # (48, 1+M)
    bias_pack = jnp.concatenate([
        p['awwb'] + p['awxb'],                                             # A
        p['au'].T,                                                         # A
        p['aub'],                                                          # 1
        p['imb'],                                                          # H
        p['cb'],                                                           # H
        p['tb'],                                                           # H
        jnp.concatenate([p['v1b'], p['sb'], p['whb']], axis=1),            # H2+S+H
        jnp.concatenate([p['v2b'], p['wmb']], axis=1),                     # 1+M
    ], axis=1)                                                             # (1, 195)
    assert w_k32.shape == (H, N_K32)
    assert bias_pack.shape == (1, N_BIAS)
    return [w_gru, b_gru, w_k32, w_cw, w_tw, w_out, bias_pack]


# ------------------------------- wrapper --------------------------------------
@jax.jit
def agent_forward(packed, x_nchw, m, desc, h_z):
    bs = x_nchw.shape[0]
    # NCHW -> (batch, n_feats, channels): matches torch's x.view(b,c,h*w).transpose(1,2)
    x_k = jnp.transpose(x_nchw.reshape(bs, C, N_FEATS), (0, 2, 1))
    mh = jnp.concatenate([m, h_z], axis=1)            # (bs, M+H)

    out = pl.pallas_call(
        agent_kernel,
        out_shape=jax.ShapeDtypeStruct((bs, OUT_W), jnp.float32),
    )(x_k, mh, desc, *packed)

    s_bin = out[:, O_SBIN:O_SBIN + S]
    s_prob = out[:, O_SPROB:O_SPROB + S]
    w = out[:, O_WBIN:O_WBIN + M]
    w_probs = out[:, O_WPROB:O_WPROB + M]
    y = out[:, O_Y:O_Y + NC]
    r = out[:, O_R:O_R + 1]
    return (s_bin, s_prob), (w, w_probs), y, r


# --------------------------- pure-JAX reference -------------------------------
def agent_reference(p, x_nchw, m, desc, h_z):
    bs = x_nchw.shape[0]
    gi = m @ p['gwi'] + p['gbi']
    gh = h_z @ p['gwh'] + p['gbh']
    r_g = jax.nn.sigmoid(gi[:, :H] + gh[:, :H])
    z_g = jax.nn.sigmoid(gi[:, H:2 * H] + gh[:, H:2 * H])
    n_g = jnp.tanh(gi[:, 2 * H:] + r_g * gh[:, 2 * H:])
    hz = (1 - z_g) * n_g + z_g * h_z
    x = jnp.transpose(x_nchw.reshape(bs, C, N_FEATS), (0, 2, 1))
    h_w = hz @ p['aww'] + p['awwb']
    h_x = x @ p['awx'] + p['awxb']
    scores = (jnp.tanh(h_w[:, None, :] + h_x) @ p['au'] + p['aub'])[..., 0]
    attn = jax.nn.softmax(scores, axis=1)
    x_attn = jnp.einsum('bn,bnc->bc', attn, x)
    h_i = jax.nn.relu(x_attn @ p['imw'] + p['imb'])
    h_c = jnp.concatenate([hz, h_i], axis=1) @ p['cw'] + p['cb']
    desc_proc = jax.nn.relu(desc @ p['tw'] + p['tb'])
    r = jax.nn.relu(h_c @ p['v1w'] + p['v1b']) @ p['v2w'] + p['v2b']
    s_prob = jax.nn.sigmoid(h_c @ p['sw'] + p['sb'])
    y = jnp.einsum('bch,bh->bc', desc_proc, h_c)
    y_scores = jax.nn.softmax(y, axis=1)
    d = jnp.einsum('bc,bch->bh', y_scores, desc_proc)
    h_w_m = jnp.tanh(h_c @ p['whw'] + p['whb'] + d @ p['wdw'])
    w_probs = jax.nn.sigmoid(h_w_m @ p['wmw'] + p['wmb'])
    return (jnp.round(s_prob), s_prob), (jnp.round(w_probs), w_probs), y, r


# --------------------------------- main ---------------------------------------
if __name__ == "__main__":
    key = jax.random.PRNGKey(0)
    kp, kx, km, kd = jax.random.split(key, 4)
    params = make_params(kp)
    packed = pack_params(params)

    x = jax.random.normal(kx, (BS, C, IMG_HW, IMG_HW), dtype=jnp.float32)   # NCHW
    m_in = jnp.round(jax.random.uniform(km, (BS, M), dtype=jnp.float32))    # binary msg
    desc = jax.random.normal(kd, (BS, NC, DESC), dtype=jnp.float32)
    h_z0 = jnp.zeros((BS, H), jnp.float32)                                   # initial_state

    (s_bin, s_prob), (w, w_probs), y, r = agent_forward(packed, x, m_in, desc, h_z0)
    jax.block_until_ready(r)

    # sanity check against pure-JAX reference (unpacked params)
    (rs_bin, rs_prob), (rw, rw_probs), ry, rr = agent_reference(params, x, m_in, desc, h_z0)
    for got, ref in [(s_prob, rs_prob), (s_bin, rs_bin), (w_probs, rw_probs),
                     (w, rw), (y, ry), (r, rr)]:
        assert jnp.allclose(got, ref, atol=1e-4, rtol=1e-4), (got, ref)

    # TODO(synk): training-mode Bernoulli sampling of s/w (host numpy RNG in the
    # original) is not implemented; this kernel reproduces the eval path (round).
    print("KERNEL_OK")
</pallas_src>

<mosaic_0001>
module attributes {stable_mosaic.version = 11 : i64} {
  func.func @agent_kernel(%arg0: memref<2x16x32xf32, #tpu.memory_space<vmem>>, %arg1: memref<2x48xf32, #tpu.memory_space<vmem>>, %arg2: memref<2x8x24xf32, #tpu.memory_space<vmem>>, %arg3: memref<48x96xf32, #tpu.memory_space<vmem>>, %arg4: memref<2x96xf32, #tpu.memory_space<vmem>>, %arg5: memref<32x145xf32, #tpu.memory_space<vmem>>, %arg6: memref<64x32xf32, #tpu.memory_space<vmem>>, %arg7: memref<24x32xf32, #tpu.memory_space<vmem>>, %arg8: memref<48x17xf32, #tpu.memory_space<vmem>>, %arg9: memref<1x195xf32, #tpu.memory_space<vmem>>, %arg10: memref<2x128xf32, #tpu.memory_space<vmem>>) attributes {dimension_semantics = [], scalar_prefetch = 0 : i64, scratch_operands = 0 : i64, tpu.core_type = #tpu.core_type<tc>} {
    %c0 = arith.constant 0 : index
    %c0_0 = arith.constant 0 : index
    %0 = vector.load %arg1[%c0, %c0_0] : memref<2x48xf32, #tpu.memory_space<vmem>>, vector<2x48xf32>
    %1 = vector.extract_strided_slice %0 {offsets = [0, 0], sizes = [2, 16], strides = [1, 1]} : vector<2x48xf32> to vector<2x16xf32>
    %2 = vector.extract_strided_slice %0 {offsets = [0, 16], sizes = [2, 32], strides = [1, 1]} : vector<2x48xf32> to vector<2x32xf32>
    %c0_1 = arith.constant 0 : index
    %c0_2 = arith.constant 0 : index
    %3 = vector.load %arg3[%c0_1, %c0_2] : memref<48x96xf32, #tpu.memory_space<vmem>>, vector<16x96xf32>
    %cst = arith.constant dense<0.000000e+00> : vector<2x96xf32>
    %4 = tpu.matmul %1, %3, %cst {dimension_numbers = #tpu.dot_dimension_numbers<[1], [0], [0], [1], [0, 0, 1, 1], [], []>} : vector<2x16xf32>, vector<16x96xf32>, vector<2x96xf32> -> vector<2x96xf32>
    %c0_3 = arith.constant 0 : index
    %c0_4 = arith.constant 0 : index
    %5 = vector.load %arg4[%c0_3, %c0_4] : memref<2x96xf32, #tpu.memory_space<vmem>>, vector<1x96xf32>
    %6 = vector.broadcast %5 : vector<1x96xf32> to vector<2x96xf32>
    %7 = arith.addf %4, %6 : vector<2x96xf32>
    %c16 = arith.constant 16 : index
    %c0_5 = arith.constant 0 : index
    %8 = vector.load %arg3[%c16, %c0_5] : memref<48x96xf32, #tpu.memory_space<vmem>>, vector<32x96xf32>
    %cst_6 = arith.constant dense<0.000000e+00> : vector<2x96xf32>
    %9 = tpu.matmul %2, %8, %cst_6 {dimension_numbers = #tpu.dot_dimension_numbers<[1], [0], [0], [1], [0, 0, 1, 1], [], []>} : vector<2x32xf32>, vector<32x96xf32>, vector<2x96xf32> -> vector<2x96xf32>
    %c1 = arith.constant 1 : index
    %c0_7 = arith.constant 0 : index
    %10 = vector.load %arg4[%c1, %c0_7] : memref<2x96xf32, #tpu.memory_space<vmem>>, vector<1x96xf32>
    %11 = vector.extract_strided_slice %7 {offsets = [0, 0], sizes = [2, 32], strides = [1, 1]} : vector<2x96xf32> to vector<2x32xf32>
    %12 = vector.extract_strided_slice %9 {offsets = [0, 0], sizes = [2, 32], strides = [1, 1]} : vector<2x96xf32> to vector<2x32xf32>
    %13 = arith.addf %11, %12 : vector<2x32xf32>
    %14 = vector.extract_strided_slice %10 {offsets = [0, 0], sizes = [1, 32], strides = [1, 1]} : vector<1x96xf32> to vector<1x32xf32>
    %15 = vector.broadcast %14 : vector<1x32xf32> to vector<2x32xf32>
    %16 = arith.addf %13, %15 : vector<2x32xf32>
    %17 = arith.negf %16 : vector<2x32xf32>
    %18 = math.exp %17 : vector<2x32xf32>
    %cst_8 = arith.constant 1.000000e+00 : f32
    %19 = vector.broadcast %cst_8 : f32 to vector<2x32xf32>
    %20 = arith.addf %19, %18 : vector<2x32xf32>
    %21 = arith.divf %19, %20 : vector<2x32xf32>
    %22 = vector.extract_strided_slice %7 {offsets = [0, 32], sizes = [2, 32], strides = [1, 1]} : vector<2x96xf32> to vector<2x32xf32>
    %23 = vector.extract_strided_slice %9 {offsets = [0, 32], sizes = [2, 32], strides = [1, 1]} : vector<2x96xf32> to vector<2x32xf32>
    %24 = arith.addf %22, %23 : vector<2x32xf32>
    %25 = vector.extract_strided_slice %10 {offsets = [0, 32], sizes = [1, 32], strides = [1, 1]} : vector<1x96xf32> to vector<1x32xf32>
    %26 = vector.broadcast %25 : vector<1x32xf32> to vector<2x32xf32>
    %27 = arith.addf %24, %26 : vector<2x32xf32>
    %28 = arith.negf %27 : vector<2x32xf32>
    %29 = math.exp %28 : vector<2x32xf32>
    %cst_9 = arith.constant 1.000000e+00 : f32
    %30 = vector.broadcast %cst_9 : f32 to vector<2x32xf32>
    %31 = arith.addf %30, %29 : vector<2x32xf32>
    %32 = arith.divf %30, %31 : vector<2x32xf32>
    %33 = vector.extract_strided_slice %7 {offsets = [0, 64], sizes = [2, 32], strides = [1, 1]} : vector<2x96xf32> to vector<2x32xf32>
    %34 = vector.extract_strided_slice %9 {offsets = [0, 64], sizes = [2, 32], strides = [1, 1]} : vector<2x96xf32> to vector<2x32xf32>
    %35 = vector.extract_strided_slice %10 {offsets = [0, 64], sizes = [1, 32], strides = [1, 1]} : vector<1x96xf32> to vector<1x32xf32>
    %36 = vector.broadcast %35 : vector<1x32xf32> to vector<2x32xf32>
    %37 = arith.addf %34, %36 : vector<2x32xf32>
    %38 = arith.mulf %21, %37 : vector<2x32xf32>
    %39 = arith.addf %33, %38 : vector<2x32xf32>
    %40 = math.tanh %39 : vector<2x32xf32>
    %cst_10 = arith.constant 1.000000e+00 : f32
    %41 = vector.broadcast %cst_10 : f32 to vector<2x32xf32>
    %42 = arith.subf %41, %32 : vector<2x32xf32>
    %43 = arith.mulf %42, %40 : vector<2x32xf32>
    %44 = arith.mulf %32, %2 : vector<2x32xf32>
    %45 = arith.addf %43, %44 : vector<2x32xf32>
    %c0_11 = arith.constant 0 : index
    %c0_12 = arith.constant 0 : index
    %c0_13 = arith.constant 0 : index
    %46 = vector.load %arg0[%c0_11, %c0_12, %c0_13] : memref<2x16x32xf32, #tpu.memory_space<vmem>>, vector<2x16x32xf32>
    %47 = vector.shape_cast %46 : vector<2x16x32xf32> to vector<32x32xf32>
    %c0_14 = arith.constant 0 : index
    %c0_15 = arith.constant 0 : index
    %48 = vector.load %arg5[%c0_14, %c0_15] : memref<32x145xf32, #tpu.memory_space<vmem>>, vector<32x16xf32>
    %cst_16 = arith.constant dense<0.000000e+00> : vector<2x16xf32>
    %49 = tpu.matmul %45, %48, %cst_16 {dimension_numbers = #tpu.dot_dimension_numbers<[1], [0], [0], [1], [0, 0, 1, 1], [], []>} : vector<2x32xf32>, vector<32x16xf32>, vector<2x16xf32> -> vector<2x16xf32>
    %c0_17 = arith.constant 0 : index
    %c16_18 = arith.constant 16 : index
    %50 = vector.load %arg5[%c0_17, %c16_18] : memref<32x145xf32, #tpu.memory_space<vmem>>, vector<32x16xf32>
    %cst_19 = arith.constant dense<0.000000e+00> : vector<32x16xf32>
    %51 = tpu.matmul %47, %50, %cst_19 {dimension_numbers = #tpu.dot_dimension_numbers<[1], [0], [0], [1], [0, 0, 1, 1], [], []>} : vector<32x32xf32>, vector<32x16xf32>, vector<32x16xf32> -> vector<32x16xf32>
    %c0_20 = arith.constant 0 : index
    %c0_21 = arith.constant 0 : index
    %52 = vector.load %arg9[%c0_20, %c0_21] : memref<1x195xf32, #tpu.memory_space<vmem>>, vector<1x16xf32>
    %53 = vector.shape_cast %49 : vector<2x16xf32> to vector<2x1x16xf32>
    %54 = vector.shape_cast %51 : vector<32x16xf32> to vector<2x16x16xf32>
    %55 = vector.broadcast %53 : vector<2x1x16xf32> to vector<2x16x16xf32>
    %56 = arith.addf %55, %54 : vector<2x16x16xf32>
    %57 = vector.shape_cast %52 : vector<1x16xf32> to vector<1x1x16xf32>
    %58 = vector.broadcast %57 : vector<1x1x16xf32> to vector<2x16x16xf32>
    %59 = arith.addf %56, %58 : vector<2x16x16xf32>
    %60 = math.tanh %59 : vector<2x16x16xf32>
    %c0_22 = arith.constant 0 : index
    %c16_23 = arith.constant 16 : index
    %61 = vector.load %arg9[%c0_22, %c16_23] : memref<1x195xf32, #tpu.memory_space<vmem>>, vector<1x16xf32>
    %c0_24 = arith.constant 0 : index
    %c32 = arith.constant 32 : index
    %62 = vector.load %arg9[%c0_24, %c32] : memref<1x195xf32, #tpu.memory_space<vmem>>, vector<1x1xf32>
    %63 = vector.shape_cast %61 : vector<1x16xf32> to vector<1x1x16xf32>
    %64 = vector.broadcast %63 : vector<1x1x16xf32> to vector<2x16x16xf32>
    %65 = arith.mulf %60, %64 : vector<2x16x16xf32>
    %cst_25 = arith.constant dense<0.000000e+00> : vector<2x16xf32>
    %66 = vector.multi_reduction <add>, %65, %cst_25 [2] : vector<2x16x16xf32> to vector<2x16xf32>
    %67 = vector.broadcast %62 : vector<1x1xf32> to vector<2x16xf32>
    %68 = arith.addf %66, %67 : vector<2x16xf32>
    %cst_26 = arith.constant dense<0xFF800000> : vector<2xf32>
    %69 = vector.multi_reduction <maximumf>, %68, %cst_26 [1] : vector<2x16xf32> to vector<2xf32>
    %70 = vector.shape_cast %69 : vector<2xf32> to vector<2x1xf32>
    %71 = vector.broadcast %70 : vector<2x1xf32> to vector<2x16xf32>
    %72 = arith.subf %68, %71 : vector<2x16xf32>
    %73 = math.exp %72 : vector<2x16xf32>
    %cst_27 = arith.constant dense<0.000000e+00> : vector<2xf32>
    %74 = vector.multi_reduction <add>, %73, %cst_27 [1] : vector<2x16xf32> to vector<2xf32>
    %75 = vector.shape_cast %74 : vector<2xf32> to vector<2x1xf32>
    %76 = vector.broadcast %75 : vector<2x1xf32> to vector<2x16xf32>
    %77 = arith.divf %73, %76 : vector<2x16xf32>
    %78 = vector.shape_cast %77 : vector<2x16xf32> to vector<2x16x1xf32>
    %79 = vector.broadcast %78 : vector<2x16x1xf32> to vector<2x16x32xf32>
    %80 = arith.mulf %79, %46 : vector<2x16x32xf32>
    %cst_28 = arith.constant dense<0.000000e+00> : vector<2x32xf32>
    %81 = vector.multi_reduction <add>, %80, %cst_28 [1] : vector<2x16x32xf32> to vector<2x32xf32>
    %c0_29 = arith.constant 0 : index
    %c32_30 = arith.constant 32 : index
    %82 = vector.load %arg5[%c0_29, %c32_30] : memref<32x145xf32, #tpu.memory_space<vmem>>, vector<32x32xf32>
    %cst_31 = arith.constant dense<0.000000e+00> : vector<2x32xf32>
    %83 = tpu.matmul %81, %82, %cst_31 {dimension_numbers = #tpu.dot_dimension_numbers<[1], [0], [0], [1], [0, 0, 1, 1], [], []>} : vector<2x32xf32>, vector<32x32xf32>, vector<2x32xf32> -> vector<2x32xf32>
    %c0_32 = arith.constant 0 : index
    %c33 = arith.constant 33 : index
    %84 = vector.load %arg9[%c0_32, %c33] : memref<1x195xf32, #tpu.memory_space<vmem>>, vector<1x32xf32>
    %85 = vector.broadcast %84 : vector<1x32xf32> to vector<2x32xf32>
    %86 = arith.addf %83, %85 : vector<2x32xf32>
    %cst_33 = arith.constant 0.000000e+00 : f32
    %87 = vector.broadcast %cst_33 : f32 to vector<2x32xf32>
    %88 = arith.maximumf %86, %87 : vector<2x32xf32>
    %89 = tpu.concatenate %45, %88 in 1 : vector<2x32xf32>, vector<2x32xf32> -> vector<2x64xf32>
    %c0_34 = arith.constant 0 : index
    %c0_35 = arith.constant 0 : index
    %90 = vector.load %arg6[%c0_34, %c0_35] : memref<64x32xf32, #tpu.memory_space<vmem>>, vector<64x32xf32>
    %cst_36 = arith.constant dense<0.000000e+00> : vector<2x32xf32>
    %91 = tpu.matmul %89, %90, %cst_36 {dimension_numbers = #tpu.dot_dimension_numbers<[1], [0], [0], [1], [0, 0, 1, 1], [], []>} : vector<2x64xf32>, vector<64x32xf32>, vector<2x32xf32> -> vector<2x32xf32>
    %c0_37 = arith.constant 0 : index
    %c65 = arith.constant 65 : index
    %92 = vector.load %arg9[%c0_37, %c65] : memref<1x195xf32, #tpu.memory_space<vmem>>, vector<1x32xf32>
    %93 = vector.broadcast %92 : vector<1x32xf32> to vector<2x32xf32>
    %94 = arith.addf %91, %93 : vector<2x32xf32>
    %c0_38 = arith.constant 0 : index
    %c0_39 = arith.constant 0 : index
    %c0_40 = arith.constant 0 : index
    %95 = vector.load %arg2[%c0_38, %c0_39, %c0_40] : memref<2x8x24xf32, #tpu.memory_space<vmem>>, vector<2x8x24xf32>
    %96 = vector.shape_cast %95 : vector<2x8x24xf32> to vector<16x24xf32>
    %c0_41 = arith.constant 0 : index
    %c0_42 = arith.constant 0 : index
    %97 = vector.load %arg7[%c0_41, %c0_42] : memref<24x32xf32, #tpu.memory_space<vmem>>, vector<24x32xf32>
    %cst_43 = arith.constant dense<0.000000e+00> : vector<16x32xf32>
    %98 = tpu.matmul %96, %97, %cst_43 {dimension_numbers = #tpu.dot_dimension_numbers<[1], [0], [0], [1], [0, 0, 1, 1], [], []>} : vector<16x24xf32>, vector<24x32xf32>, vector<16x32xf32> -> vector<16x32xf32>
    %c0_44 = arith.constant 0 : index
    %c97 = arith.constant 97 : index
    %99 = vector.load %arg9[%c0_44, %c97] : memref<1x195xf32, #tpu.memory_space<vmem>>, vector<1x32xf32>
    %100 = vector.broadcast %99 : vector<1x32xf32> to vector<16x32xf32>
    %101 = arith.addf %98, %100 : vector<16x32xf32>
    %cst_45 = arith.constant 0.000000e+00 : f32
    %102 = vector.broadcast %cst_45 : f32 to vector<16x32xf32>
    %103 = arith.maximumf %101, %102 : vector<16x32xf32>
    %104 = vector.shape_cast %103 : vector<16x32xf32> to vector<2x8x32xf32>
    %c0_46 = arith.constant 0 : index
    %c64 = arith.constant 64 : index
    %105 = vector.load %arg5[%c0_46, %c64] : memref<32x145xf32, #tpu.memory_space<vmem>>, vector<32x49xf32>
    %cst_47 = arith.constant dense<0.000000e+00> : vector<2x49xf32>
    %106 = tpu.matmul %94, %105, %cst_47 {dimension_numbers = #tpu.dot_dimension_numbers<[1], [0], [0], [1], [0, 0, 1, 1], [], []>} : vector<2x32xf32>, vector<32x49xf32>, vector<2x49xf32> -> vector<2x49xf32>
    %c0_48 = arith.constant 0 : index
    %c129 = arith.constant 129 : index
    %107 = vector.load %arg9[%c0_48, %c129] : memref<1x195xf32, #tpu.memory_space<vmem>>, vector<1x49xf32>
    %108 = vector.broadcast %107 : vector<1x49xf32> to vector<2x49xf32>
    %109 = arith.addf %106, %108 : vector<2x49xf32>
    %110 = vector.extract_strided_slice %109 {offsets = [0, 0], sizes = [2, 16], strides = [1, 1]} : vector<2x49xf32> to vector<2x16xf32>
    %cst_49 = arith.constant 0.000000e+00 : f32
    %111 = vector.broadcast %cst_49 : f32 to vector<2x16xf32>
    %112 = arith.maximumf %110, %111 : vector<2x16xf32>
    %113 = vector.extract_strided_slice %109 {offsets = [0, 16], sizes = [2, 1], strides = [1, 1]} : vector<2x49xf32> to vector<2x1xf32>
    %114 = arith.negf %113 : vector<2x1xf32>
    %115 = math.exp %114 : vector<2x1xf32>
    %cst_50 = arith.constant 1.000000e+00 : f32
    %116 = vector.broadcast %cst_50 : f32 to vector<2x1xf32>
    %117 = arith.addf %116, %115 : vector<2x1xf32>
    %118 = arith.divf %116, %117 : vector<2x1xf32>
    %119 = vector.extract_strided_slice %109 {offsets = [0, 17], sizes = [2, 32], strides = [1, 1]} : vector<2x49xf32> to vector<2x32xf32>
    %120 = vector.shape_cast %94 : vector<2x32xf32> to vector<2x1x32xf32>
    %121 = vector.broadcast %120 : vector<2x1x32xf32> to vector<2x8x32xf32>
    %122 = arith.mulf %104, %121 : vector<2x8x32xf32>
    %cst_51 = arith.constant dense<0.000000e+00> : vector<2x8xf32>
    %123 = vector.multi_reduction <add>, %122, %cst_51 [2] : vector<2x8x32xf32> to vector<2x8xf32>
    %cst_52 = arith.constant dense<0xFF800000> : vector<2xf32>
    %124 = vector.multi_reduction <maximumf>, %123, %cst_52 [1] : vector<2x8xf32> to vector<2xf32>
    %125 = vector.shape_cast %124 : vector<2xf32> to vector<2x1xf32>
    %126 = vector.broadcast %125 : vector<2x1xf32> to vector<2x8xf32>
    %127 = arith.subf %123, %126 : vector<2x8xf32>
    %128 = math.exp %127 : vector<2x8xf32>
    %cst_53 = arith.constant dense<0.000000e+00> : vector<2xf32>
    %129 = vector.multi_reduction <add>, %128, %cst_53 [1] : vector<2x8xf32> to vector<2xf32>
    %130 = vector.shape_cast %129 : vector<2xf32> to vector<2x1xf32>
    %131 = vector.broadcast %130 : vector<2x1xf32> to vector<2x8xf32>
    %132 = arith.divf %128, %131 : vector<2x8xf32>
    %133 = vector.shape_cast %132 : vector<2x8xf32> to vector<2x8x1xf32>
    %134 = vector.broadcast %133 : vector<2x8x1xf32> to vector<2x8x32xf32>
    %135 = arith.mulf %134, %104 : vector<2x8x32xf32>
    %cst_54 = arith.constant dense<0.000000e+00> : vector<2x32xf32>
    %136 = vector.multi_reduction <add>, %135, %cst_54 [1] : vector<2x8x32xf32> to vector<2x32xf32>
    %c0_55 = arith.constant 0 : index
    %c113 = arith.constant 113 : index
    %137 = vector.load %arg5[%c0_55, %c113] : memref<32x145xf32, #tpu.memory_space<vmem>>, vector<32x32xf32>
    %cst_56 = arith.constant dense<0.000000e+00> : vector<2x32xf32>
    %138 = tpu.matmul %136, %137, %cst_56 {dimension_numbers = #tpu.dot_dimension_numbers<[1], [0], [0], [1], [0, 0, 1, 1], [], []>} : vector<2x32xf32>, vector<32x32xf32>, vector<2x32xf32> -> vector<2x32xf32>
    %139 = arith.addf %119, %138 : vector<2x32xf32>
    %140 = math.tanh %139 : vector<2x32xf32>
    %141 = tpu.concatenate %112, %140 in 1 : vector<2x16xf32>, vector<2x32xf32> -> vector<2x48xf32>
    %c0_57 = arith.constant 0 : index
    %c0_58 = arith.constant 0 : index
    %142 = vector.load %arg8[%c0_57, %c0_58] : memref<48x17xf32, #tpu.memory_space<vmem>>, vector<48x17xf32>
    %cst_59 = arith.constant dense<0.000000e+00> : vector<2x17xf32>
    %143 = tpu.matmul %141, %142, %cst_59 {dimension_numbers = #tpu.dot_dimension_numbers<[1], [0], [0], [1], [0, 0, 1, 1], [], []>} : vector<2x48xf32>, vector<48x17xf32>, vector<2x17xf32> -> vector<2x17xf32>
    %c0_60 = arith.constant 0 : index
    %c178 = arith.constant 178 : index
    %144 = vector.load %arg9[%c0_60, %c178] : memref<1x195xf32, #tpu.memory_space<vmem>>, vector<1x17xf32>
    %145 = vector.broadcast %144 : vector<1x17xf32> to vector<2x17xf32>
    %146 = arith.addf %143, %145 : vector<2x17xf32>
    %147 = vector.extract_strided_slice %146 {offsets = [0, 0], sizes = [2, 1], strides = [1, 1]} : vector<2x17xf32> to vector<2x1xf32>
    %148 = vector.extract_strided_slice %146 {offsets = [0, 1], sizes = [2, 16], strides = [1, 1]} : vector<2x17xf32> to vector<2x16xf32>
    %149 = arith.negf %148 : vector<2x16xf32>
    %150 = math.exp %149 : vector<2x16xf32>
    %cst_61 = arith.constant 1.000000e+00 : f32
    %151 = vector.broadcast %cst_61 : f32 to vector<2x16xf32>
    %152 = arith.addf %151, %150 : vector<2x16xf32>
    %153 = arith.divf %151, %152 : vector<2x16xf32>
    %154 = math.roundeven %153 : vector<2x16xf32>
    %155 = math.roundeven %118 : vector<2x1xf32>
    %cst_62 = arith.constant 0.000000e+00 : f32
    %156 = vector.broadcast %cst_62 : f32 to vector<2x85xf32>
    %157 = tpu.concatenate %155, %118, %154, %153, %123, %147, %156 in 1 : vector<2x1xf32>, vector<2x1xf32>, vector<2x16xf32>, vector<2x16xf32>, vector<2x8xf32>, vector<2x1xf32>, vector<2x85xf32> -> vector<2x128xf32>
    %c0_63 = arith.constant 0 : index
    %c0_64 = arith.constant 0 : index
    %158 = vector.load %arg10[%c0_63, %c0_64] : memref<2x128xf32, #tpu.memory_space<vmem>>, vector<2x128xf32>
    tpu.vector_store %arg10[%c0_63, %c0_64], %157 {strides = array<i32>} : memref<2x128xf32, #tpu.memory_space<vmem>>, vector<2x128xf32>,
    return
  }
}

</mosaic_0001>

<llo_original>
// kernel: agent_forward.1
$region0: #{agent_forward.1}
  #allocation0 [shape = 'u32[]', space=smem, size = 0x4, offset = 0x4, fixed_abs, tag = 'smem constant byte address 0x4 - core index']
  #allocation1 [shape = 'u32[144,128]{1,0:T(1,128)}', space=vmem, size = 0x12000, scoped, tag = 'internal scratch']
  %s0 = inlined_call_operand.vmem [shape: f32[2,16,32], index: 0, kind: input, shape index: {}]
  %s1 = inlined_call_operand.vmem [shape: f32[2,48], index: 1, kind: input, shape index: {}]
  %s2 = inlined_call_operand.vmem [shape: f32[2,8,24], index: 2, kind: input, shape index: {}]
  %s3 = inlined_call_operand.vmem [shape: f32[48,96], index: 3, kind: input, shape index: {}]
  %s4 = inlined_call_operand.hbm [shape: f32[2,96], index: 4, kind: input, shape index: {}]
  %s5 = inlined_call_operand.vmem [shape: f32[32,145], index: 5, kind: input, shape index: {}]
  %s6 = inlined_call_operand.vmem [shape: f32[64,32], index: 6, kind: input, shape index: {}]
  %s7 = inlined_call_operand.hbm [shape: f32[24,32], index: 7, kind: input, shape index: {}]
  %s8 = inlined_call_operand.vmem [shape: f32[48,17], index: 8, kind: input, shape index: {}]
  %s9 = inlined_call_operand.vmem [shape: f32[1,195], index: 9, kind: input, shape index: {}]
  %s10 = inlined_call_operand.vmem [shape: f32[2,128], index: 10, kind: output, shape index: {}]
  %s11 = sld [smem:[#allocation0]]
  $region58: #{agent_forward.1} parent=0
    _
  %s13 = ssub.s32 1, %s11
  %s14 = scalar_select 0, %s13, %s11
  $region1: #{agent_forward.1} parent=0
    #allocation2 [shape = 'u8[1024]{0}', space=vmem, size = 0x400, scoped, tag = 'input window, operand 4, single buffered']
    #allocation3 [shape = 's32[1]{0}', space=sflag, size = 0x4, scoped, tag = 'scoped memory for agent_forward.1']
    #allocation4 [shape = 'u8[12288]{0}', space=vmem, size = 0x3000, scoped, tag = 'input window, operand 7, single buffered']
    #allocation5 [shape = 's32[1]{0}', space=sflag, size = 0x4, scoped, tag = 'scoped memory for agent_forward.1']
    %15 = vsyncpa [#allocation3], 0
    %16 = vsyncpa [#allocation5], 0
    // Predicated region
    $region2: #{agent_forward.1} parent=1 // pred_check
      _
    $region3: #{agent_forward.1} parent=1 // pred_check_branch
      %18 = sbr.rel (0) target = $region5
    $region4: #{agent_forward.1} parent=1 // pred_region
      _
    $region5: #{agent_forward.1} parent=1 // pred_fallthru
      _
    // Predicated region
    $region6: #{agent_forward.1} parent=1 // pred_check
      _
    $region7: #{agent_forward.1} parent=1 // pred_check_branch
      %20 = sbr.rel (0) target = $region9
    $region8: #{agent_forward.1} parent=1 // pred_region
      _
    $region9: #{agent_forward.1} parent=1 // pred_fallthru
      _
    // Predicated region
    $region10: #{agent_forward.1} parent=1 // pred_check
      _
    $region11: #{agent_forward.1} parent=1 // pred_check_branch
      %22 = sbr.rel (0) target = $region13
    $region12: #{agent_forward.1} parent=1 // pred_region
      _
    $region13: #{agent_forward.1} parent=1 // pred_fallthru
      _
    // Predicated region
    $region14: #{agent_forward.1} parent=1 // pred_check
      _
    $region15: #{agent_forward.1} parent=1 // pred_check_branch
      %24 = sbr.rel (0) target = $region17
    $region16: #{agent_forward.1} parent=1 // pred_region
      _
    $region17: #{agent_forward.1} parent=1 // pred_fallthru
      _
    // Predicated region
    $region18: #{agent_forward.1} parent=1 // pred_check
      _
    $region19: #{agent_forward.1} parent=1 // pred_check_branch
      %26 = sbr.rel (0) target = $region21
    $region20: #{agent_forward.1} parent=1 // pred_region
      %s28 = ssub.s32 32, 32
      %29 = vsyncadd [#allocation3], %s28
      %s31 = sshll.u32 [#allocation2], 4
      %s32 = int_to_ptr.vmem [resolvable:$true] %s31
      %34 = dma.hbm_to_vmem [thread:$0]  %s4, 32, %s32, [#allocation3]
    $region21: #{agent_forward.1} parent=1 // pred_fallthru
      _
    // Predicated region
    $region22: #{agent_forward.1} parent=1 // pred_check
      _
    $region23: #{agent_forward.1} parent=1 // pred_check_branch
      %36 = sbr.rel (0) target = $region25
    $region24: #{agent_forward.1} parent=1 // pred_region
      _
    $region25: #{agent_forward.1} parent=1 // pred_fallthru
      _
    // Predicated region
    $region26: #{agent_forward.1} parent=1 // pred_check
      _
    $region27: #{agent_forward.1} parent=1 // pred_check_branch
      %38 = sbr.rel (0) target = $region29
    $region28: #{agent_forward.1} parent=1 // pred_region
      _
    $region29: #{agent_forward.1} parent=1 // pred_fallthru
      _
    // Predicated region
    $region30: #{agent_forward.1} parent=1 // pred_check
      _
    $region31: #{agent_forward.1} parent=1 // pred_check_branch
      %40 = sbr.rel (0) target = $region33
    $region32: #{agent_forward.1} parent=1 // pred_region
      %s42 = ssub.s32 384, 384
      %43 = vsyncadd [#allocation5], %s42
      %s44 = sshll.u32 [#allocation4], 4
      %s45 = int_to_ptr.vmem [resolvable:$true] %s44
      %50 = dma.hbm_to_vmem [thread:$0]  %s7, 384, %s45, [#allocation5], 128, 128, 8
    $region33: #{agent_forward.1} parent=1 // pred_fallthru
      _
    // Predicated region
    $region34: #{agent_forward.1} parent=1 // pred_check
      _
    $region35: #{agent_forward.1} parent=1 // pred_check_branch
      %52 = sbr.rel (0) target = $region37
    $region36: #{agent_forward.1} parent=1 // pred_region
      _
    $region37: #{agent_forward.1} parent=1 // pred_fallthru
      _
    // Predicated region
    $region38: #{agent_forward.1} parent=1 // pred_check
      _
    $region39: #{agent_forward.1} parent=1 // pred_check_branch
      %54 = sbr.rel (0) target = $region41
    $region40: #{agent_forward.1} parent=1 // pred_region
      _
    $region41: #{agent_forward.1} parent=1 // pred_fallthru
      _
    // Predicated region
    $region42: #{agent_forward.1} parent=1 // pred_check
      _
    $region43: #{agent_forward.1} parent=1 // pred_check_branch
      %56 = sbr.rel (0) target = $region45
    $region44: #{agent_forward.1} parent=1 // pred_region
      %57 = dma.done [#allocation3], 32
    $region45: #{agent_forward.1} parent=1 // pred_fallthru
      _
    // Predicated region
    $region46: #{agent_forward.1} parent=1 // pred_check
      _
    $region47: #{agent_forward.1} parent=1 // pred_check_branch
      %59 = sbr.rel (0) target = $region49
    $region48: #{agent_forward.1} parent=1 // pred_region
      %60 = dma.done [#allocation5], 384
    $region49: #{agent_forward.1} parent=1 // pred_fallthru
      _
    %v61 = vld [vmem:[%s1] sm:$0x3]
    %v62 = vld [vmem:[%s3] sm:$0xff]
    %v63 = vld [vmem:[%s3 + $0x8] sm:$0xff]
    %v64 = vld [vmem:[#allocation2] sm:$0x1]
    %v65 = vlaneseq
    %v66 = vshrl.u32 %v65, 7
    %v67 = vsub.s32 0, %v66
    %v68 = vrot.slane %v64, %v67
    %vm69 = vcmask 130048
    %v71 = vsel %vm69, %v61, 0
    %73 = vmatprep.subr.mxu0 0.0
    %74 = vmatpush1.msra.mxu0 %v62
    %75 = vmatprep.subr.mxu0 0.0
    %76 = vmatpush1.msra.mxu0 %v63
    %77 = vmatprep.subr.mxu0 0.0
    %78 = vmatpush1.msra.mxu0 0.0
    %79 = vmatprep.subr.mxu0 0.0
    %80 = vmatpush1.msra.mxu0 0.0
    %81 = vmatprep.subr.mxu0 0.0
    %82 = vmatpush1.msra.mxu0 0.0
    %83 = vmatprep.subr.mxu0 0.0
    %84 = vmatpush1.msra.mxu0 0.0
    %85 = vmatprep.subr.mxu0 0.0
    %86 = vmatpush1.msra.mxu0 0.0
    %87 = vmatprep.subr.mxu0 0.0
    %88 = vmatpush1.msra.mxu0 0.0
    %89 = vmatprep.subr.mxu0 0.0
    %90 = vmatpush1.msra.mxu0 0.0
    %91 = vmatprep.subr.mxu0 0.0
    %92 = vmatpush1.msra.mxu0 0.0
    %93 = vmatprep.subr.mxu0 0.0
    %94 = vmatpush1.msra.mxu0 0.0
    %95 = vmatprep.subr.mxu0 0.0
    %96 = vmatpush1.msra.mxu0 0.0
    %97 = vmatprep.subr.mxu0 0.0
    %98 = vmatpush1.msra.mxu0 0.0
    %99 = vmatprep.subr.mxu0 0.0
    %100 = vmatpush1.msra.mxu0 0.0
    %101 = vmatprep.subr.mxu0 0.0
    %102 = vmatpush1.msra.mxu0 0.0
    %103 = vmatprep.subr.mxu0 0.0
    %104 = vmatpush1.msra.mxu0 0.0
    %105 = vmatprep.subr.mxu0 0.0
    %106 = vmatpush1.msra.mxu0 0.0
    %107 = vmatprep.subr.mxu0 0.0
    %108 = vmatpush1.msra.mxu0 0.0
    %109 = vmatprep.subr.mxu0 0.0
    %110 = vmatpush1.msra.mxu0 0.0
    %111 = vmatprep.subr.mxu0 0.0
    %112 = vmatpush1.msra.mxu0 0.0
    %113 = vmatprep.subr.mxu0 0.0
    %114 = vmatpush1.msra.mxu0 0.0
    %115 = vmatprep.subr.mxu0 0.0
    %116 = vmatpush1.msra.mxu0 0.0
    %117 = vmatprep.subr.mxu0 0.0
    %118 = vmatpush1.msra.mxu0 0.0
    %119 = vmatprep.subr.mxu0 0.0
    %120 = vmatpush1.msra.mxu0 0.0
    %121 = vmatprep.subr.mxu0 0.0
    %122 = vmatpush1.msra.mxu0 0.0
    %123 = vmatprep.subr.mxu0 0.0
    %124 = vmatpush1.msra.mxu0 0.0
    %125 = vmatprep.subr.mxu0 0.0
    %126 = vmatpush1.msra.mxu0 0.0
    %127 = vmatprep.subr.mxu0 0.0
    %128 = vmatpush1.msra.mxu0 0.0
    %129 = vmatprep.subr.mxu0 0.0
    %130 = vmatpush1.msra.mxu0 0.0
    %131 = vmatprep.subr.mxu0 0.0
    %132 = vmatpush1.msra.mxu0 0.0
    %133 = vmatprep.subr.mxu0 0.0
    %134 = vmatpush1.msra.mxu0 0.0
    %135 = vmatprep.subr.mxu0 0.0
    %136 = vmatpush1.msra.mxu0 0.0
    %137 = vmatprep.mubr.f32.mxu0 0.0
    %138 = vmatmul.mubr.f32.gmra.mrb[0].mxu0 %v71
    %v139 = vpop.f32.mrb[0].mxu0
    %v140 = vadd.f32 %v68, %v139
    %v141 = vpop.f32.mrb[0].mxu0
    %142 = vdwg.mxu0
    %v143 = vld [vmem:[%s3 + $0x10] sm:$0xff]
    %v144 = vld [vmem:[%s3 + $0x18] sm:$0xff]
    %v145 = vld [vmem:[%s3 + $0x20] sm:$0xff]
    %v146 = vld [vmem:[%s3 + $0x28] sm:$0xff]
    %147 = vrot.lane.b32.xlu0 %v61, 112
    %v148 = vpop.permute.xlu0 %147
    %vm149 = vcmask 261120
    %v150 = vsel %vm149, %v148, 0
    %152 = vmatprep.subr.mxu0 0.0
    %153 = vmatpush1.msra.mxu0 %v143
    %154 = vmatprep.subr.mxu0 0.0
    %155 = vmatpush1.msra.mxu0 %v144
    %156 = vmatprep.subr.mxu0 0.0
    %157 = vmatpush1.msra.mxu0 %v145
    %158 = vmatprep.subr.mxu0 0.0
    %159 = vmatpush1.msra.mxu0 %v146
    %160 = vmatprep.subr.mxu0 0.0
    %161 = vmatpush1.msra.mxu0 0.0
    %162 = vmatprep.subr.mxu0 0.0
    %163 = vmatpush1.msra.mxu0 0.0
    %164 = vmatprep.subr.mxu0 0.0
    %165 = vmatpush1.msra.mxu0 0.0
    %166 = vmatprep.subr.mxu0 0.0
    %167 = vmatpush1.msra.mxu0 0.0
    %168 = vmatprep.subr.mxu0 0.0
    %169 = vmatpush1.msra.mxu0 0.0
    %170 = vmatprep.subr.mxu0 0.0
    %171 = vmatpush1.msra.mxu0 0.0
    %172 = vmatprep.subr.mxu0 0.0
    %173 = vmatpush1.msra.mxu0 0.0
    %174 = vmatprep.subr.mxu0 0.0
    %175 = vmatpush1.msra.mxu0 0.0
    %176 = vmatprep.subr.mxu0 0.0
    %177 = vmatpush1.msra.mxu0 0.0
    %178 = vmatprep.subr.mxu0 0.0
    %179 = vmatpush1.msra.mxu0 0.0
    %180 = vmatprep.subr.mxu0 0.0
    %181 = vmatpush1.msra.mxu0 0.0
    %182 = vmatprep.subr.mxu0 0.0
    %183 = vmatpush1.msra.mxu0 0.0
    %184 = vmatprep.subr.mxu0 0.0
    %185 = vmatpush1.msra.mxu0 0.0
    %186 = vmatprep.subr.mxu0 0.0
    %187 = vmatpush1.msra.mxu0 0.0
    %188 = vmatprep.subr.mxu0 0.0
    %189 = vmatpush1.msra.mxu0 0.0
    %190 = vmatprep.subr.mxu0 0.0
    %191 = vmatpush1.msra.mxu0 0.0
    %192 = vmatprep.subr.mxu0 0.0
    %193 = vmatpush1.msra.mxu0 0.0
    %194 = vmatprep.subr.mxu0 0.0
    %195 = vmatpush1.msra.mxu0 0.0
    %196 = vmatprep.subr.mxu0 0.0
    %197 = vmatpush1.msra.mxu0 0.0
    %198 = vmatprep.subr.mxu0 0.0
    %199 = vmatpush1.msra.mxu0 0.0
    %200 = vmatprep.subr.mxu0 0.0
    %201 = vmatpush1.msra.mxu0 0.0
    %202 = vmatprep.subr.mxu0 0.0
    %203 = vmatpush1.msra.mxu0 0.0
    %204 = vmatprep.subr.mxu0 0.0
    %205 = vmatpush1.msra.mxu0 0.0
    %206 = vmatprep.subr.mxu0 0.0
    %207 = vmatpush1.msra.mxu0 0.0
    %208 = vmatprep.subr.mxu0 0.0
    %209 = vmatpush1.msra.mxu0 0.0
    %210 = vmatprep.subr.mxu0 0.0
    %211 = vmatpush1.msra.mxu0 0.0
    %212 = vmatprep.subr.mxu0 0.0
    %213 = vmatpush1.msra.mxu0 0.0
    %214 = vmatprep.subr.mxu0 0.0
    %215 = vmatpush1.msra.mxu0 0.0
    %216 = vmatprep.mubr.f32.mxu0 0.0
    %217 = vmatmul.mubr.f32.gmra.mrb[0].mxu0 %v150
    %v218 = vpop.f32.mrb[0].mxu0
    %v219 = vadd.f32 0.0, %v218
    %v220 = vpop.f32.mrb[0].mxu0
    %221 = vdwg.mxu0
    %v222 = vld [vmem:[#allocation2 + $0x1] sm:$0x1]
    %v223 = vadd.f32 %v140, %v219
    %v224 = vlaneseq
    %v225 = vshrl.u32 %v224, 7
    %v226 = vsub.s32 0, %v225
    %v227 = vrot.slane %v222, %v226
    %v228 = vadd.f32 %v223, %v227
    %v229 = vxor.u32 %v228, 2147483648
    %v230 = vmul.f32 %v229, 1.442695
    %v231 = vpow.pop %v230
    %v232 = vadd.f32 %v231, 1.0
    %v233 = vrcp.pop %v232
    %v234 = vmul.f32 1.0, %v233
    %v235 = vadd.f32 %v219, %v227
    %237 = vrot.lane.b32.xlu0 %v235, 64
    %v238 = vpop.permute.xlu0 %237
    %v240 = vmul.f32 %v234, %v238
    %242 = vrot.lane.b32.xlu0 %v240, 64
    %v243 = vpop.permute.xlu0 %242
    %v245 = vadd.f32 %v140, %v243
    %v246 = vtanh.pop %v245
    %v247 = vsub.f32 1.0, %v234
    %249 = vrot.lane.b32.xlu0 %v246, 96
    %v250 = vpop.permute.xlu0 %249
    %v252 = vmul.f32 %v247, %v250
    %253 = vrot.lane.b32.xlu0 %v61, 16
    %v254 = vpop.permute.xlu0 %253
    %v256 = vmul.f32 %v234, %v254
    %v257 = vadd.f32 %v252, %v256
    %v258 = vld [vmem:[%s0] sm:$0xff]
    %v259 = vld [vmem:[%s0 + $0x8] sm:$0xff]
    %v260 = vld [vmem:[%s0 + $0x10] sm:$0xff]
    %v261 = vld [vmem:[%s0 + $0x18] sm:$0xff]
    %v262 = vld [vmem:[%s5] sm:$0xff]
    %v263 = vld [vmem:[%s5 + $0x10] sm:$0xff]
    %v264 = vld [vmem:[%s5 + $0x20] sm:$0xff]
    %v265 = vld [vmem:[%s5 + $0x30] sm:$0xff]
    %267 = vrot.lane.b32.xlu0 %v257, 96
    %v268 = vpop.permute.xlu0 %267
    %v269 = vsel %vm149, %v268, 0
    %271 = vmatprep.subr.mxu0 0.0
    %272 = vmatpush1.msra.mxu0 %v262
    %273 = vmatprep.subr.mxu0 0.0
    %274 = vmatpush1.msra.mxu0 %v263
    %275 = vmatprep.subr.mxu0 0.0
    %276 = vmatpush1.msra.mxu0 %v264
    %277 = vmatprep.subr.mxu0 0.0
    %278 = vmatpush1.msra.mxu0 %v265
    %279 = vmatprep.subr.mxu0 0.0
    %280 = vmatpush1.msra.mxu0 0.0
    %281 = vmatprep.subr.mxu0 0.0
    %282 = vmatpush1.msra.mxu0 0.0
    %283 = vmatprep.subr.mxu0 0.0
    %284 = vmatpush1.msra.mxu0 0.0
    %285 = vmatprep.subr.mxu0 0.0
    %286 = vmatpush1.msra.mxu0 0.0
    %287 = vmatprep.subr.mxu0 0.0
    %288 = vmatpush1.msra.mxu0 0.0
    %289 = vmatprep.subr.mxu0 0.0
    %290 = vmatpush1.msra.mxu0 0.0
    %291 = vmatprep.subr.mxu0 0.0
    %292 = vmatpush1.msra.mxu0 0.0
    %293 = vmatprep.subr.mxu0 0.0
    %294 = vmatpush1.msra.mxu0 0.0
    %295 = vmatprep.subr.mxu0 0.0
    %296 = vmatpush1.msra.mxu0 0.0
    %297 = vmatprep.subr.mxu0 0.0
    %298 = vmatpush1.msra.mxu0 0.0
    %299 = vmatprep.subr.mxu0 0.0
    %300 = vmatpush1.msra.mxu0 0.0
    %301 = vmatprep.subr.mxu0 0.0
    %302 = vmatpush1.msra.mxu0 0.0
    %303 = vmatprep.subr.mxu0 0.0
    %304 = vmatpush1.msra.mxu0 0.0
    %305 = vmatprep.subr.mxu0 0.0
    %306 = vmatpush1.msra.mxu0 0.0
    %307 = vmatprep.subr.mxu0 0.0
    %308 = vmatpush1.msra.mxu0 0.0
    %309 = vmatprep.subr.mxu0 0.0
    %310 = vmatpush1.msra.mxu0 0.0
    %311 = vmatprep.subr.mxu0 0.0
    %312 = vmatpush1.msra.mxu0 0.0
    %313 = vmatprep.subr.mxu0 0.0
    %314 = vmatpush1.msra.mxu0 0.0
    %315 = vmatprep.subr.mxu0 0.0
    %316 = vmatpush1.msra.mxu0 0.0
    %317 = vmatprep.subr.mxu0 0.0
    %318 = vmatpush1.msra.mxu0 0.0
    %319 = vmatprep.subr.mxu0 0.0
    %320 = vmatpush1.msra.mxu0 0.0
    %321 = vmatprep.subr.mxu0 0.0
    %322 = vmatpush1.msra.mxu0 0.0
    %323 = vmatprep.subr.mxu0 0.0
    %324 = vmatpush1.msra.mxu0 0.0
    %325 = vmatprep.subr.mxu0 0.0
    %326 = vmatpush1.msra.mxu0 0.0
    %327 = vmatprep.subr.mxu0 0.0
    %328 = vmatpush1.msra.mxu0 0.0
    %329 = vmatprep.subr.mxu0 0.0
    %330 = vmatpush1.msra.mxu0 0.0
    %331 = vmatprep.subr.mxu0 0.0
    %332 = vmatpush1.msra.mxu0 0.0
    %333 = vmatprep.subr.mxu0 0.0
    %334 = vmatpush1.msra.mxu0 0.0
    %335 = vmatprep.mubr.f32.mxu0 0.0
    %336 = vmatmul.mubr.f32.gmra.mrb[0].mxu0 %v269
    %v337 = vpop.f32.mrb[0].mxu0
    %v338 = vadd.f32 0.0, %v337
    %v339 = vpop.f32.mrb[0].mxu0
    %340 = vdwg.mxu0
    %345 = vrot.lane.b32.xlu0 %v262, 112
    %v346 = vpop.permute.xlu0 %345
    %347 = vrot.lane.b32.xlu0 %v263, 112
    %v348 = vpop.permute.xlu0 %347
    %349 = vrot.lane.b32.xlu0 %v264, 112
    %v350 = vpop.permute.xlu0 %349
    %351 = vrot.lane.b32.xlu0 %v265, 112
    %v352 = vpop.permute.xlu0 %351
    %v358 = vsel %vm149, %v258, 0
    %v361 = vsel %vm149, %v259, 0
    %v364 = vsel %vm149, %v260, 0
    %v367 = vsel %vm149, %v261, 0
    %369 = vmatprep.subr.mxu0 0.0
    %370 = vmatpush1.msra.mxu0 %v346
    %371 = vmatprep.subr.mxu0 0.0
    %372 = vmatpush1.msra.mxu0 %v348
    %373 = vmatprep.subr.mxu0 0.0
    %374 = vmatpush1.msra.mxu0 %v350
    %375 = vmatprep.subr.mxu0 0.0
    %376 = vmatpush1.msra.mxu0 %v352
    %377 = vmatprep.subr.mxu0 0.0
    %378 = vmatpush1.msra.mxu0 0.0
    %379 = vmatprep.subr.mxu0 0.0
    %380 = vmatpush1.msra.mxu0 0.0
    %381 = vmatprep.subr.mxu0 0.0
    %382 = vmatpush1.msra.mxu0 0.0
    %383 = vmatprep.subr.mxu0 0.0
    %384 = vmatpush1.msra.mxu0 0.0
    %385 = vmatprep.subr.mxu0 0.0
    %386 = vmatpush1.msra.mxu0 0.0
    %387 = vmatprep.subr.mxu0 0.0
    %388 = vmatpush1.msra.mxu0 0.0
    %389 = vmatprep.subr.mxu0 0.0
    %390 = vmatpush1.msra.mxu0 0.0
    %391 = vmatprep.subr.mxu0 0.0
    %392 = vmatpush1.msra.mxu0 0.0
    %393 = vmatprep.subr.mxu0 0.0
    %394 = vmatpush1.msra.mxu0 0.0
    %395 = vmatprep.subr.mxu0 0.0
    %396 = vmatpush1.msra.mxu0 0.0
    %397 = vmatprep.subr.mxu0 0.0
    %398 = vmatpush1.msra.mxu0 0.0
    %399 = vmatprep.subr.mxu0 0.0
    %400 = vmatpush1.msra.mxu0 0.0
    %401 = vmatprep.subr.mxu0 0.0
    %402 = vmatpush1.msra.mxu0 0.0
    %403 = vmatprep.subr.mxu0 0.0
    %404 = vmatpush1.msra.mxu0 0.0
    %405 = vmatprep.subr.mxu0 0.0
    %406 = vmatpush1.msra.mxu0 0.0
    %407 = vmatprep.subr.mxu0 0.0
    %408 = vmatpush1.msra.mxu0 0.0
    %409 = vmatprep.subr.mxu0 0.0
    %410 = vmatpush1.msra.mxu0 0.0
    %411 = vmatprep.subr.mxu0 0.0
    %412 = vmatpush1.msra.mxu0 0.0
    %413 = vmatprep.subr.mxu0 0.0
    %414 = vmatpush1.msra.mxu0 0.0
    %415 = vmatprep.subr.mxu0 0.0
    %416 = vmatpush1.msra.mxu0 0.0
    %417 = vmatprep.subr.mxu0 0.0
    %418 = vmatpush1.msra.mxu0 0.0
    %419 = vmatprep.subr.mxu0 0.0
    %420 = vmatpush1.msra.mxu0 0.0
    %421 = vmatprep.subr.mxu0 0.0
    %422 = vmatpush1.msra.mxu0 0.0
    %423 = vmatprep.subr.mxu0 0.0
    %424 = vmatpush1.msra.mxu0 0.0
    %425 = vmatprep.subr.mxu0 0.0
    %426 = vmatpush1.msra.mxu0 0.0
    %427 = vmatprep.subr.mxu0 0.0
    %428 = vmatpush1.msra.mxu0 0.0
    %429 = vmatprep.subr.mxu0 0.0
    %430 = vmatpush1.msra.mxu0 0.0
    %431 = vmatprep.subr.mxu0 0.0
    %432 = vmatpush1.msra.mxu0 0.0
    %433 = vmatprep.mubr.f32.mxu0 0.0
    %434 = vmatmul.mubr.f32.gmra.mrb[0].mxu0 %v358
    %v435 = vpop.f32.mrb[0].mxu0
    %v436 = vadd.f32 0.0, %v435
    %v437 = vpop.f32.mrb[0].mxu0
    %438 = vmatprep.mubr.f32.mxu0 0.0
    %439 = vmatmul.mubr.f32.gmra.mrb[0].mxu0 %v361
    %v440 = vpop.f32.mrb[0].mxu0
    %v441 = vadd.f32 0.0, %v440
    %v442 = vpop.f32.mrb[0].mxu0
    %443 = vmatprep.mubr.f32.mxu0 0.0
    %444 = vmatmul.mubr.f32.gmra.mrb[0].mxu0 %v364
    %v445 = vpop.f32.mrb[0].mxu0
    %v446 = vadd.f32 0.0, %v445
    %v447 = vpop.f32.mrb[0].mxu0
    %448 = vmatprep.mubr.f32.mxu0 0.0
    %449 = vmatmul.mubr.f32.gmra.mrb[0].mxu0 %v367
    %v450 = vpop.f32.mrb[0].mxu0
    %v451 = vadd.f32 0.0, %v450
    %v452 = vpop.f32.mrb[0].mxu0
    %453 = vdwg.mxu0
    %v454 = vld [vmem:[%s9] sm:$0x1]
    %v457 = vunpack.c.l.s4 1966171168
    %v458 = vunpack.c.0.s8 %v457
    %v459 = vlaneseq
    %v460 = vshrl.u32 %v459, 7
    %v461 = vsub.s32 %v458, %v460
    %v462 = vrot.slane %v338, %v461
    %v463 = vcombine.high %v462, %v462
    %v465 = vunpack.c.l.s4 1966171168
    %v466 = vunpack.c.0.s8 %v465
    %v467 = vlaneseq
    %v468 = vshrl.u32 %v467, 7
    %v469 = vsub.s32 %v466, %v468
    %v470 = vrot.slane %v462, %v469
    %v472 = vunpack.c.l.s4 1966171168
    %v473 = vunpack.c.0.s8 %v472
    %v474 = vlaneseq
    %v475 = vshrl.u32 %v474, 7
    %v476 = vsub.s32 %v473, %v475
    %v477 = vrot.slane %v463, %v476
    %v478 = vlaneseq
    %v479 = vshrl.u32 %v478, 7
    %v480 = vsub.s32 0, %v479
    %v481 = vrot.slane %v470, %v480
    %v482 = vlaneseq
    %v483 = vshrl.u32 %v482, 7
    %v484 = vsub.s32 0, %v483
    %v485 = vrot.slane %v477, %v484
    %v488 = vadd.f32 %v481, %v436
    %v489 = vadd.f32 %v481, %v441
    %v490 = vadd.f32 %v485, %v446
    %v491 = vadd.f32 %v485, %v451
    %v493 = vlaneseq
    %v494 = vshrl.u32 %v493, 7
    %v495 = vsub.s32 0, %v494
    %v496 = vrot.slane %v454, %v495
    %v498 = vadd.f32 %v488, %v496
    %v499 = vadd.f32 %v489, %v496
    %v500 = vadd.f32 %v490, %v496
    %v501 = vadd.f32 %v491, %v496
    %v502 = vtanh.pop %v498
    %v503 = vtanh.pop %v499
    %v504 = vtanh.pop %v500
    %v505 = vtanh.pop %v501
    %506 = vrot.lane.b32.xlu0 %v496, 112
    %v507 = vpop.permute.xlu0 %506
    %v509 = vmul.f32 %v502, %v507
    %v510 = vmul.f32 %v503, %v507
    %v511 = vmul.f32 %v504, %v507
    %v512 = vmul.f32 %v505, %v507
    %v513 = vsel %vm69, %v509, 0.0
    %514 = vadd.xlane.f32.xlu0 %v513
    %v515 = vpop.xlane.xlu0 %514
    %v516 = vsel %vm69, %v510, 0.0
    %517 = vadd.xlane.f32.xlu0 %v516
    %v518 = vpop.xlane.xlu0 %517
    %v519 = vsel %vm69, %v511, 0.0
    %520 = vadd.xlane.f32.xlu0 %v519
    %v521 = vpop.xlane.xlu0 %520
    %v522 = vsel %vm69, %v512, 0.0
    %523 = vadd.xlane.f32.xlu0 %v522
    %v524 = vpop.xlane.xlu0 %523
    %525 = vset.pattern.permute.xlu0 32
    %526 = vperm.xlu0 %525, %v496
    %v527 = vpop.permute.xlu0 %526
    %v529 = vadd.f32 %v515, %v527
    %v530 = vadd.f32 %v518, %v527
    %v531 = vadd.f32 %v521, %v527
    %v532 = vadd.f32 %v524, %v527
    %v537 = vlaneseq
    %v538 = vand.u32 %v537, 127
    %v539 = vlaneseq
    %v540 = vshrl.u32 %v539, 7
    %v541 = vsub.s32 %v538, %v540
    %v542 = vrot.slane %v529, %v541
    %v543 = vadd.s32 %v538, 4294967288
    %v544 = vlaneseq
    %v545 = vshrl.u32 %v544, 7
    %v546 = vsub.s32 %v543, %v545
    %v547 = vrot.slane %v530, %v546
    %vm548 = vcmask 130112
    %v549 = vsel %vm548, %v547, %v542
    %v550 = vlaneseq
    %v551 = vshrl.u32 %v550, 7
    %v552 = vsub.s32 %v538, %v551
    %v553 = vrot.slane %v531, %v552
    %v554 = vlaneseq
    %v555 = vshrl.u32 %v554, 7
    %v556 = vsub.s32 %v543, %v555
    %v557 = vrot.slane %v532, %v556
    %v558 = vsel %vm548, %v557, %v553
    %vm559 = vcmask 1041409
    %v560 = vsel %vm559, %v558, %v549
    %vm562 = vcmask 123904
    %v563 = vsel %vm562, %v560, -inf
    %564 = vmax.xlane.f32.xlu0 %v563
    %v565 = vpop.xlane.xlu0 %564
    %v567 = vlaneseq
    %v568 = vshrl.u32 %v567, 7
    %v569 = vsub.s32 0, %v568
    %v570 = vrot.slane %v565, %v569
    %v571 = vlaneseq
    %v572 = vshrl.u32 %v571, 7
    %v573 = vsub.s32 1, %v572
    %v574 = vrot.slane %v565, %v573
    %v577 = vsub.f32 %v529, %v570
    %v578 = vsub.f32 %v530, %v570
    %v579 = vsub.f32 %v531, %v574
    %v580 = vsub.f32 %v532, %v574
    %v581 = vmul.f32 %v577, 1.442695
    %v582 = vpow.pop %v581
    %v583 = vmul.f32 %v578, 1.442695
    %v584 = vpow.pop %v583
    %v585 = vmul.f32 %v579, 1.442695
    %v586 = vpow.pop %v585
    %v587 = vmul.f32 %v580, 1.442695
    %v588 = vpow.pop %v587
    %593 = vset.pattern.permute.xlu0 0
    %594 = vperm.xlu0 %593, %v582
    %v595 = vpop.permute.xlu0 %594
    %596 = vset.pattern.permute.xlu0 0
    %597 = vperm.xlu0 %596, %v584
    %v598 = vpop.permute.xlu0 %597
    %599 = vset.pattern.permute.xlu0 0
    %600 = vperm.xlu0 %599, %v586
    %v601 = vpop.permute.xlu0 %600
    %602 = vset.pattern.permute.xlu0 0
    %603 = vperm.xlu0 %602, %v588
    %v604 = vpop.permute.xlu0 %603
    %v605 = vlaneseq
    %v606 = vshrl.u32 %v605, 7
    %v607 = vsub.s32 %v538, %v606
    %v608 = vrot.slane %v595, %v607
    %v609 = vlaneseq
    %v610 = vshrl.u32 %v609, 7
    %v611 = vsub.s32 %v543, %v610
    %v612 = vrot.slane %v598, %v611
    %v613 = vsel %vm548, %v612, %v608
    %v614 = vlaneseq
    %v615 = vshrl.u32 %v614, 7
    %v616 = vsub.s32 %v538, %v615
    %v617 = vrot.slane %v601, %v616
    %v618 = vlaneseq
    %v619 = vshrl.u32 %v618, 7
    %v620 = vsub.s32 %v543, %v619
    %v621 = vrot.slane %v604, %v620
    %v622 = vsel %vm548, %v621, %v617
    %v623 = vsel %vm559, %v622, %v613
    %v625 = vsel %vm562, %v623, 0.0
    %626 = vadd.xlane.f32.xlu0 %v625
    %v627 = vpop.xlane.xlu0 %626
    %v629 = vlaneseq
    %v630 = vshrl.u32 %v629, 7
    %v631 = vsub.s32 0, %v630
    %v632 = vrot.slane %v627, %v631
    %v633 = vlaneseq
    %v634 = vshrl.u32 %v633, 7
    %v635 = vsub.s32 1, %v634
    %v636 = vrot.slane %v627, %v635
    %v639 = vrcp.pop %v632
    %v640 = vmul.f32 %v582, %v639
    %v641 = vmul.f32 %v584, %v639
    %v642 = vrcp.pop %v636
    %v643 = vmul.f32 %v586, %v642
    %v644 = vmul.f32 %v588, %v642
    %646 = vset.pattern.permute.xlu0 0
    %647 = vperm.xlu0 %646, %v640
    %v648 = vpop.permute.xlu0 %647
    %651 = vset.pattern.permute.xlu0 0
    %652 = vperm.xlu0 %651, %v641
    %v653 = vpop.permute.xlu0 %652
    %656 = vset.pattern.permute.xlu0 0
    %657 = vperm.xlu0 %656, %v643
    %v658 = vpop.permute.xlu0 %657
    %661 = vset.pattern.permute.xlu0 0
    %662 = vperm.xlu0 %661, %v644
    %v663 = vpop.permute.xlu0 %662
    %v665 = vmul.f32 %v648, %v258
    %v666 = vmul.f32 %v653, %v259
    %v667 = vmul.f32 %v658, %v260
    %v668 = vmul.f32 %v663, %v261
    %v669 = vsel %vm149, %v665, 0.0
    %v670 = vsel %vm149, %v666, 0.0
    %v671 = vadd.f32 %v669, %v670
    %v672 = vrot.slane %v671, 4
    %v673 = vadd.f32 %v671, %v672
    %v674 = vrot.slane %v673, 2
    %v675 = vadd.f32 %v673, %v674
    %v676 = vrot.slane %v675, 1
    %v677 = vadd.f32 %v675, %v676
    %v678 = vsel %vm149, %v667, 0.0
    %v679 = vsel %vm149, %v668, 0.0
    %v680 = vadd.f32 %v678, %v679
    %v681 = vrot.slane %v680, 4
    %v682 = vadd.f32 %v680, %v681
    %v683 = vrot.slane %v682, 2
    %v684 = vadd.f32 %v682, %v683
    %v685 = vrot.slane %v684, 1
    %v686 = vadd.f32 %v684, %v685
    %v687 = vld [vmem:[%s5] sm:$0xff]
    %v688 = vld [vmem:[%s5 + $0x10] sm:$0xff]
    %v689 = vld [vmem:[%s5 + $0x20] sm:$0xff]
    %v690 = vld [vmem:[%s5 + $0x30] sm:$0xff]
    %v693 = vsel %vm559, %v686, %v677
    %698 = vrot.lane.b32.xlu0 %v687, 96
    %v699 = vpop.permute.xlu0 %698
    %700 = vrot.lane.b32.xlu0 %v688, 96
    %v701 = vpop.permute.xlu0 %700
    %702 = vrot.lane.b32.xlu0 %v689, 96
    %v703 = vpop.permute.xlu0 %702
    %704 = vrot.lane.b32.xlu0 %v690, 96
    %v705 = vpop.permute.xlu0 %704
    %710 = vrot.lane.b32.xlu0 %v496, 95
    %v711 = vpop.permute.xlu0 %710
    %v713 = vsel %vm149, %v693, 0
    %715 = vmatprep.subr.mxu0 0.0
    %716 = vmatpush1.msra.mxu0 %v699
    %717 = vmatprep.subr.mxu0 0.0
    %718 = vmatpush1.msra.mxu0 %v701
    %719 = vmatprep.subr.mxu0 0.0
    %720 = vmatpush1.msra.mxu0 %v703
    %721 = vmatprep.subr.mxu0 0.0
    %722 = vmatpush1.msra.mxu0 %v705
    %723 = vmatprep.subr.mxu0 0.0
    %724 = vmatpush1.msra.mxu0 0.0
    %725 = vmatprep.subr.mxu0 0.0
    %726 = vmatpush1.msra.mxu0 0.0
    %727 = vmatprep.subr.mxu0 0.0
    %728 = vmatpush1.msra.mxu0 0.0
    %729 = vmatprep.subr.mxu0 0.0
    %730 = vmatpush1.msra.mxu0 0.0
    %731 = vmatprep.subr.mxu0 0.0
    %732 = vmatpush1.msra.mxu0 0.0
    %733 = vmatprep.subr.mxu0 0.0
    %734 = vmatpush1.msra.mxu0 0.0
    %735 = vmatprep.subr.mxu0 0.0
    %736 = vmatpush1.msra.mxu0 0.0
    %737 = vmatprep.subr.mxu0 0.0
    %738 = vmatpush1.msra.mxu0 0.0
    %739 = vmatprep.subr.mxu0 0.0
    %740 = vmatpush1.msra.mxu0 0.0
    %741 = vmatprep.subr.mxu0 0.0
    %742 = vmatpush1.msra.mxu0 0.0
    %743 = vmatprep.subr.mxu0 0.0
    %744 = vmatpush1.msra.mxu0 0.0
    %745 = vmatprep.subr.mxu0 0.0
    %746 = vmatpush1.msra.mxu0 0.0
    %747 = vmatprep.subr.mxu0 0.0
    %748 = vmatpush1.msra.mxu0 0.0
    %749 = vmatprep.subr.mxu0 0.0
    %750 = vmatpush1.msra.mxu0 0.0
    %751 = vmatprep.subr.mxu0 0.0
    %752 = vmatpush1.msra.mxu0 0.0
    %753 = vmatprep.subr.mxu0 0.0
    %754 = vmatpush1.msra.mxu0 0.0
    %755 = vmatprep.subr.mxu0 0.0
    %756 = vmatpush1.msra.mxu0 0.0
    %757 = vmatprep.subr.mxu0 0.0
    %758 = vmatpush1.msra.mxu0 0.0
    %759 = vmatprep.subr.mxu0 0.0
    %760 = vmatpush1.msra.mxu0 0.0
    %761 = vmatprep.subr.mxu0 0.0
    %762 = vmatpush1.msra.mxu0 0.0
    %763 = vmatprep.subr.mxu0 0.0
    %764 = vmatpush1.msra.mxu0 0.0
    %765 = vmatprep.subr.mxu0 0.0
    %766 = vmatpush1.msra.mxu0 0.0
    %767 = vmatprep.subr.mxu0 0.0
    %768 = vmatpush1.msra.mxu0 0.0
    %769 = vmatprep.subr.mxu0 0.0
    %770 = vmatpush1.msra.mxu0 0.0
    %771 = vmatprep.subr.mxu0 0.0
    %772 = vmatpush1.msra.mxu0 0.0
    %773 = vmatprep.subr.mxu0 0.0
    %774 = vmatpush1.msra.mxu0 0.0
    %775 = vmatprep.subr.mxu0 0.0
    %776 = vmatpush1.msra.mxu0 0.0
    %777 = vmatprep.subr.mxu0 0.0
    %778 = vmatpush1.msra.mxu0 0.0
    %779 = vmatprep.mubr.f32.mxu0 0.0
    %780 = vmatmul.mubr.f32.gmra.mrb[0].mxu0 %v713
    %v781 = vpop.f32.mrb[0].mxu0
    %v782 = vadd.f32 %v711, %v781
    %v783 = vpop.f32.mrb[0].mxu0
    %784 = vdwg.mxu0
    %v785 = vmax.f32 %v782, 0.0
    %788 = vrot.lane.b32.xlu0 %v785, 32
    %v789 = vpop.permute.xlu0 %788
    %v791 = vsel %vm149, %v268, %v789
    %v792 = vld [vmem:[%s6] sm:$0xff]
    %v793 = vld [vmem:[%s6 + $0x8] sm:$0xff]
    %v794 = vld [vmem:[%s6 + $0x10] sm:$0xff]
    %v795 = vld [vmem:[%s6 + $0x18] sm:$0xff]
    %v796 = vld [vmem:[%s6 + $0x20] sm:$0xff]
    %v797 = vld [vmem:[%s6 + $0x28] sm:$0xff]
    %v798 = vld [vmem:[%s6 + $0x30] sm:$0xff]
    %v799 = vld [vmem:[%s6 + $0x38] sm:$0xff]
    %800 = vrot.lane.b32.xlu0 %v496, 63
    %v801 = vpop.permute.xlu0 %800
    %vm803 = vcmask 523264
    %v805 = vsel %vm803, %v791, 0
    %807 = vmatprep.subr.mxu0 0.0
    %808 = vmatpush1.msra.mxu0 %v792
    %809 = vmatprep.subr.mxu0 0.0
    %810 = vmatpush1.msra.mxu0 %v793
    %811 = vmatprep.subr.mxu0 0.0
    %812 = vmatpush1.msra.mxu0 %v794
    %813 = vmatprep.subr.mxu0 0.0
    %814 = vmatpush1.msra.mxu0 %v795
    %815 = vmatprep.subr.mxu0 0.0
    %816 = vmatpush1.msra.mxu0 %v796
    %817 = vmatprep.subr.mxu0 0.0
    %818 = vmatpush1.msra.mxu0 %v797
    %819 = vmatprep.subr.mxu0 0.0
    %820 = vmatpush1.msra.mxu0 %v798
    %821 = vmatprep.subr.mxu0 0.0
    %822 = vmatpush1.msra.mxu0 %v799
    %823 = vmatprep.subr.mxu0 0.0
    %824 = vmatpush1.msra.mxu0 0.0
    %825 = vmatprep.subr.mxu0 0.0
    %826 = vmatpush1.msra.mxu0 0.0
    %827 = vmatprep.subr.mxu0 0.0
    %828 = vmatpush1.msra.mxu0 0.0
    %829 = vmatprep.subr.mxu0 0.0
    %830 = vmatpush1.msra.mxu0 0.0
    %831 = vmatprep.subr.mxu0 0.0
    %832 = vmatpush1.msra.mxu0 0.0
    %833 = vmatprep.subr.mxu0 0.0
    %834 = vmatpush1.msra.mxu0 0.0
    %835 = vmatprep.subr.mxu0 0.0
    %836 = vmatpush1.msra.mxu0 0.0
    %837 = vmatprep.subr.mxu0 0.0
    %838 = vmatpush1.msra.mxu0 0.0
    %839 = vmatprep.subr.mxu0 0.0
    %840 = vmatpush1.msra.mxu0 0.0
    %841 = vmatprep.subr.mxu0 0.0
    %842 = vmatpush1.msra.mxu0 0.0
    %843 = vmatprep.subr.mxu0 0.0
    %844 = vmatpush1.msra.mxu0 0.0
    %845 = vmatprep.subr.mxu0 0.0
    %846 = vmatpush1.msra.mxu0 0.0
    %847 = vmatprep.subr.mxu0 0.0
    %848 = vmatpush1.msra.mxu0 0.0
    %849 = vmatprep.subr.mxu0 0.0
    %850 = vmatpush1.msra.mxu0 0.0
    %851 = vmatprep.subr.mxu0 0.0
    %852 = vmatpush1.msra.mxu0 0.0
    %853 = vmatprep.subr.mxu0 0.0
    %854 = vmatpush1.msra.mxu0 0.0
    %855 = vmatprep.subr.mxu0 0.0
    %856 = vmatpush1.msra.mxu0 0.0
    %857 = vmatprep.subr.mxu0 0.0
    %858 = vmatpush1.msra.mxu0 0.0
    %859 = vmatprep.subr.mxu0 0.0
    %860 = vmatpush1.msra.mxu0 0.0
    %861 = vmatprep.subr.mxu0 0.0
    %862 = vmatpush1.msra.mxu0 0.0
    %863 = vmatprep.subr.mxu0 0.0
    %864 = vmatpush1.msra.mxu0 0.0
    %865 = vmatprep.subr.mxu0 0.0
    %866 = vmatpush1.msra.mxu0 0.0
    %867 = vmatprep.subr.mxu0 0.0
    %868 = vmatpush1.msra.mxu0 0.0
    %869 = vmatprep.subr.mxu0 0.0
    %870 = vmatpush1.msra.mxu0 0.0
    %871 = vmatprep.mubr.f32.mxu0 0.0
    %872 = vmatmul.mubr.f32.gmra.mrb[0].mxu0 %v805
    %v873 = vpop.f32.mrb[0].mxu0
    %v874 = vadd.f32 %v801, %v873
    %v875 = vpop.f32.mrb[0].mxu0
    %876 = vdwg.mxu0
    %v877 = vld [vmem:[%s2] sm:$0xff]
    %v878 = vld [vmem:[%s2 + $0x8] sm:$0xff]
    %v879 = vld [vmem:[#allocation4] sm:$0xff]
    %v880 = vld [vmem:[#allocation4 + $0x8] sm:$0xff]
    %v881 = vld [vmem:[#allocation4 + $0x10] sm:$0xff]
    %v882 = vld [vmem:[%s9] sm:$0x3]
    %v884 = vlaneseq
    %v885 = vshrl.u32 %v884, 7
    %v886 = vsub.s32 0, %v885
    %v887 = vrot.slane %v882, %v886
    %v888 = vlaneseq
    %v889 = vshrl.u32 %v888, 7
    %v890 = vsub.s32 1, %v889
    %v891 = vrot.slane %v882, %v890
    %892 = vrot.lane.b32.xlu0 %v887, 31
    %v893 = vpop.permute.xlu0 %892
    %894 = vrot.lane.b32.xlu0 %v891, 31
    %v895 = vpop.permute.xlu0 %894
    %vm896 = vcmask 252928
    %v897 = vsel %vm896, %v893, %v895
    %vm899 = vcmask 195584
    %v901 = vsel %vm899, %v877, 0
    %v904 = vsel %vm899, %v878, 0
    %906 = vmatprep.subr.mxu0 0.0
    %907 = vmatpush1.msra.mxu0 %v879
    %908 = vmatprep.subr.mxu0 0.0
    %909 = vmatpush1.msra.mxu0 %v880
    %910 = vmatprep.subr.mxu0 0.0
    %911 = vmatpush1.msra.mxu0 %v881
    %912 = vmatprep.subr.mxu0 0.0
    %913 = vmatpush1.msra.mxu0 0.0
    %914 = vmatprep.subr.mxu0 0.0
    %915 = vmatpush1.msra.mxu0 0.0
    %916 = vmatprep.subr.mxu0 0.0
    %917 = vmatpush1.msra.mxu0 0.0
    %918 = vmatprep.subr.mxu0 0.0
    %919 = vmatpush1.msra.mxu0 0.0
    %920 = vmatprep.subr.mxu0 0.0
    %921 = vmatpush1.msra.mxu0 0.0
    %922 = vmatprep.subr.mxu0 0.0
    %923 = vmatpush1.msra.mxu0 0.0
    %924 = vmatprep.subr.mxu0 0.0
    %925 = vmatpush1.msra.mxu0 0.0
    %926 = vmatprep.subr.mxu0 0.0
    %927 = vmatpush1.msra.mxu0 0.0
    %928 = vmatprep.subr.mxu0 0.0
    %929 = vmatpush1.msra.mxu0 0.0
    %930 = vmatprep.subr.mxu0 0.0
    %931 = vmatpush1.msra.mxu0 0.0
    %932 = vmatprep.subr.mxu0 0.0
    %933 = vmatpush1.msra.mxu0 0.0
    %934 = vmatprep.subr.mxu0 0.0
    %935 = vmatpush1.msra.mxu0 0.0
    %936 = vmatprep.subr.mxu0 0.0
    %937 = vmatpush1.msra.mxu0 0.0
    %938 = vmatprep.subr.mxu0 0.0
    %939 = vmatpush1.msra.mxu0 0.0
    %940 = vmatprep.subr.mxu0 0.0
    %941 = vmatpush1.msra.mxu0 0.0
    %942 = vmatprep.subr.mxu0 0.0
    %943 = vmatpush1.msra.mxu0 0.0
    %944 = vmatprep.subr.mxu0 0.0
    %945 = vmatpush1.msra.mxu0 0.0
    %946 = vmatprep.subr.mxu0 0.0
    %947 = vmatpush1.msra.mxu0 0.0
    %948 = vmatprep.subr.mxu0 0.0
    %949 = vmatpush1.msra.mxu0 0.0
    %950 = vmatprep.subr.mxu0 0.0
    %951 = vmatpush1.msra.mxu0 0.0
    %952 = vmatprep.subr.mxu0 0.0
    %953 = vmatpush1.msra.mxu0 0.0
    %954 = vmatprep.subr.mxu0 0.0
    %955 = vmatpush1.msra.mxu0 0.0
    %956 = vmatprep.subr.mxu0 0.0
    %957 = vmatpush1.msra.mxu0 0.0
    %958 = vmatprep.subr.mxu0 0.0
    %959 = vmatpush1.msra.mxu0 0.0
    %960 = vmatprep.subr.mxu0 0.0
    %961 = vmatpush1.msra.mxu0 0.0
    %962 = vmatprep.subr.mxu0 0.0
    %963 = vmatpush1.msra.mxu0 0.0
    %964 = vmatprep.subr.mxu0 0.0
    %965 = vmatpush1.msra.mxu0 0.0
    %966 = vmatprep.subr.mxu0 0.0
    %967 = vmatpush1.msra.mxu0 0.0
    %968 = vmatprep.subr.mxu0 0.0
    %969 = vmatpush1.msra.mxu0 0.0
    %970 = vmatprep.mubr.f32.mxu0 0.0
    %971 = vmatmul.mubr.f32.gmra.mrb[0].mxu0 %v901
    %v972 = vpop.f32.mrb[0].mxu0
    %v973 = vadd.f32 %v897, %v972
    %v974 = vpop.f32.mrb[0].mxu0
    %975 = vmatprep.mubr.f32.mxu0 0.0
    %976 = vmatmul.mubr.f32.gmra.mrb[0].mxu0 %v904
    %v977 = vpop.f32.mrb[0].mxu0
    %v978 = vadd.f32 %v897, %v977
    %v979 = vpop.f32.mrb[0].mxu0
    %980 = vdwg.mxu0
    %v981 = vmax.f32 %v973, 0.0
    %v982 = vmax.f32 %v978, 0.0
    %v983 = vld [vmem:[%s9 + $0x1] sm:$0x1]
    %v985 = vlaneseq
    %v986 = vshrl.u32 %v985, 7
    %v987 = vsub.s32 0, %v986
    %v988 = vrot.slane %v983, %v987
    %989 = vrot.lane.b32.xlu0 %v687, 64
    %v990 = vpop.permute.xlu0 %989
    %991 = vrot.lane.b32.xlu0 %v688, 64
    %v992 = vpop.permute.xlu0 %991
    %993 = vrot.lane.b32.xlu0 %v689, 64
    %v994 = vpop.permute.xlu0 %993
    %995 = vrot.lane.b32.xlu0 %v690, 64
    %v996 = vpop.permute.xlu0 %995
    %1001 = vrot.lane.b32.xlu0 %v988, 127
    %v1002 = vpop.permute.xlu0 %1001
    %v1005 = vsel %vm149, %v874, 0
    %1007 = vmatprep.subr.mxu0 0.0
    %1008 = vmatpush1.msra.mxu0 %v990
    %1009 = vmatprep.subr.mxu0 0.0
    %1010 = vmatpush1.msra.mxu0 %v992
    %1011 = vmatprep.subr.mxu0 0.0
    %1012 = vmatpush1.msra.mxu0 %v994
    %1013 = vmatprep.subr.mxu0 0.0
    %1014 = vmatpush1.msra.mxu0 %v996
    %1015 = vmatprep.subr.mxu0 0.0
    %1016 = vmatpush1.msra.mxu0 0.0
    %1017 = vmatprep.subr.mxu0 0.0
    %1018 = vmatpush1.msra.mxu0 0.0
    %1019 = vmatprep.subr.mxu0 0.0
    %1020 = vmatpush1.msra.mxu0 0.0
    %1021 = vmatprep.subr.mxu0 0.0
    %1022 = vmatpush1.msra.mxu0 0.0
    %1023 = vmatprep.subr.mxu0 0.0
    %1024 = vmatpush1.msra.mxu0 0.0
    %1025 = vmatprep.subr.mxu0 0.0
    %1026 = vmatpush1.msra.mxu0 0.0
    %1027 = vmatprep.subr.mxu0 0.0
    %1028 = vmatpush1.msra.mxu0 0.0
    %1029 = vmatprep.subr.mxu0 0.0
    %1030 = vmatpush1.msra.mxu0 0.0
    %1031 = vmatprep.subr.mxu0 0.0
    %1032 = vmatpush1.msra.mxu0 0.0
    %1033 = vmatprep.subr.mxu0 0.0
    %1034 = vmatpush1.msra.mxu0 0.0
    %1035 = vmatprep.subr.mxu0 0.0
    %1036 = vmatpush1.msra.mxu0 0.0
    %1037 = vmatprep.subr.mxu0 0.0
    %1038 = vmatpush1.msra.mxu0 0.0
    %1039 = vmatprep.subr.mxu0 0.0
    %1040 = vmatpush1.msra.mxu0 0.0
    %1041 = vmatprep.subr.mxu0 0.0
    %1042 = vmatpush1.msra.mxu0 0.0
    %1043 = vmatprep.subr.mxu0 0.0
    %1044 = vmatpush1.msra.mxu0 0.0
    %1045 = vmatprep.subr.mxu0 0.0
    %1046 = vmatpush1.msra.mxu0 0.0
    %1047 = vmatprep.subr.mxu0 0.0
    %1048 = vmatpush1.msra.mxu0 0.0
    %1049 = vmatprep.subr.mxu0 0.0
    %1050 = vmatpush1.msra.mxu0 0.0
    %1051 = vmatprep.subr.mxu0 0.0
    %1052 = vmatpush1.msra.mxu0 0.0
    %1053 = vmatprep.subr.mxu0 0.0
    %1054 = vmatpush1.msra.mxu0 0.0
    %1055 = vmatprep.subr.mxu0 0.0
    %1056 = vmatpush1.msra.mxu0 0.0
    %1057 = vmatprep.subr.mxu0 0.0
    %1058 = vmatpush1.msra.mxu0 0.0
    %1059 = vmatprep.subr.mxu0 0.0
    %1060 = vmatpush1.msra.mxu0 0.0
    %1061 = vmatprep.subr.mxu0 0.0
    %1062 = vmatpush1.msra.mxu0 0.0
    %1063 = vmatprep.subr.mxu0 0.0
    %1064 = vmatpush1.msra.mxu0 0.0
    %1065 = vmatprep.subr.mxu0 0.0
    %1066 = vmatpush1.msra.mxu0 0.0
    %1067 = vmatprep.subr.mxu0 0.0
    %1068 = vmatpush1.msra.mxu0 0.0
    %1069 = vmatprep.subr.mxu0 0.0
    %1070 = vmatpush1.msra.mxu0 0.0
    %1071 = vmatprep.mubr.f32.mxu0 0.0
    %1072 = vmatmul.mubr.f32.gmra.mrb[0].mxu0 %v1005
    %v1073 = vpop.f32.mrb[0].mxu0
    %v1074 = vadd.f32 %v1002, %v1073
    %v1075 = vpop.f32.mrb[0].mxu0
    %1076 = vdwg.mxu0
    %v1077 = vmax.f32 %v1074, 0.0
    %v1078 = vxor.u32 %v1074, 2147483648
    %v1079 = vmul.f32 %v1078, 1.442695
    %v1080 = vpow.pop %v1079
    %v1081 = vadd.f32 %v1080, 1.0
    %v1082 = vrcp.pop %v1081
    %v1083 = vmul.f32 1.0, %v1082
    %v1085 = vunpack.c.l.s4 1966171168
    %v1086 = vunpack.c.0.s8 %v1085
    %v1087 = vlaneseq
    %v1088 = vshrl.u32 %v1087, 7
    %v1089 = vsub.s32 %v1086, %v1088
    %v1090 = vrot.slane %v874, %v1089
    %v1091 = vcombine.high %v1090, %v1090
    %v1093 = vunpack.c.l.s4 1966171168
    %v1094 = vunpack.c.0.s8 %v1093
    %v1095 = vlaneseq
    %v1096 = vshrl.u32 %v1095, 7
    %v1097 = vsub.s32 %v1094, %v1096
    %v1098 = vrot.slane %v1090, %v1097
    %v1100 = vunpack.c.l.s4 1966171168
    %v1101 = vunpack.c.0.s8 %v1100
    %v1102 = vlaneseq
    %v1103 = vshrl.u32 %v1102, 7
    %v1104 = vsub.s32 %v1101, %v1103
    %v1105 = vrot.slane %v1091, %v1104
    %v1106 = vlaneseq
    %v1107 = vshrl.u32 %v1106, 7
    %v1108 = vsub.s32 0, %v1107
    %v1109 = vrot.slane %v1098, %v1108
    %v1110 = vlaneseq
    %v1111 = vshrl.u32 %v1110, 7
    %v1112 = vsub.s32 0, %v1111
    %v1113 = vrot.slane %v1105, %v1112
    %v1116 = vmul.f32 %v981, %v1109
    %v1117 = vmul.f32 %v982, %v1113
    %v1118 = vsel %vm149, %v1116, 0.0
    %1119 = vadd.xlane.f32.xlu0 %v1118
    %v1120 = vpop.xlane.xlu0 %1119
    %v1121 = vsel %vm149, %v1117, 0.0
    %1122 = vadd.xlane.f32.xlu0 %v1121
    %v1123 = vpop.xlane.xlu0 %1122
    %v1126 = vlaneseq
    %v1127 = vshrl.u32 %v1126, 7
    %v1128 = vsub.s32 %v538, %v1127
    %v1129 = vrot.slane %v1120, %v1128
    %v1130 = vlaneseq
    %v1131 = vshrl.u32 %v1130, 7
    %v1132 = vsub.s32 %v538, %v1131
    %v1133 = vrot.slane %v1123, %v1132
    %v1134 = vsel %vm559, %v1133, %v1129
    %vm1136 = vcmask 58368
    %v1137 = vsel %vm1136, %v1134, -inf
    %1138 = vmax.xlane.f32.xlu0 %v1137
    %v1139 = vpop.xlane.xlu0 %1138
    %v1141 = vlaneseq
    %v1142 = vshrl.u32 %v1141, 7
    %v1143 = vsub.s32 0, %v1142
    %v1144 = vrot.slane %v1139, %v1143
    %v1145 = vlaneseq
    %v1146 = vshrl.u32 %v1145, 7
    %v1147 = vsub.s32 1, %v1146
    %v1148 = vrot.slane %v1139, %v1147
    %v1151 = vsub.f32 %v1120, %v1144
    %v1152 = vsub.f32 %v1123, %v1148
    %v1153 = vmul.f32 %v1151, 1.442695
    %v1154 = vpow.pop %v1153
    %v1155 = vmul.f32 %v1152, 1.442695
    %v1156 = vpow.pop %v1155
    %1159 = vset.pattern.permute.xlu0 0
    %1160 = vperm.xlu0 %1159, %v1154
    %v1161 = vpop.permute.xlu0 %1160
    %1162 = vset.pattern.permute.xlu0 0
    %1163 = vperm.xlu0 %1162, %v1156
    %v1164 = vpop.permute.xlu0 %1163
    %v1165 = vlaneseq
    %v1166 = vshrl.u32 %v1165, 7
    %v1167 = vsub.s32 %v538, %v1166
    %v1168 = vrot.slane %v1161, %v1167
    %v1169 = vlaneseq
    %v1170 = vshrl.u32 %v1169, 7
    %v1171 = vsub.s32 %v538, %v1170
    %v1172 = vrot.slane %v1164, %v1171
    %v1173 = vsel %vm559, %v1172, %v1168
    %v1175 = vsel %vm1136, %v1173, 0.0
    %1176 = vadd.xlane.f32.xlu0 %v1175
    %v1177 = vpop.xlane.xlu0 %1176
    %v1179 = vlaneseq
    %v1180 = vshrl.u32 %v1179, 7
    %v1181 = vsub.s32 0, %v1180
    %v1182 = vrot.slane %v1177, %v1181
    %v1183 = vlaneseq
    %v1184 = vshrl.u32 %v1183, 7
    %v1185 = vsub.s32 1, %v1184
    %v1186 = vrot.slane %v1177, %v1185
    %v1189 = vrcp.pop %v1182
    %v1190 = vmul.f32 %v1154, %v1189
    %v1191 = vrcp.pop %v1186
    %v1192 = vmul.f32 %v1156, %v1191
    %1194 = vset.pattern.permute.xlu0 0
    %1195 = vperm.xlu0 %1194, %v1190
    %v1196 = vpop.permute.xlu0 %1195
    %1199 = vset.pattern.permute.xlu0 0
    %1200 = vperm.xlu0 %1199, %v1192
    %v1201 = vpop.permute.xlu0 %1200
    %v1203 = vmul.f32 %v1196, %v981
    %v1204 = vmul.f32 %v1201, %v982
    %v1205 = vsel %vm149, %v1203, 0.0
    %v1206 = vrot.slane %v1205, 4
    %v1207 = vadd.f32 %v1205, %v1206
    %v1208 = vrot.slane %v1207, 2
    %v1209 = vadd.f32 %v1207, %v1208
    %v1210 = vrot.slane %v1209, 1
    %v1211 = vadd.f32 %v1209, %v1210
    %v1212 = vsel %vm149, %v1204, 0.0
    %v1213 = vrot.slane %v1212, 4
    %v1214 = vadd.f32 %v1212, %v1213
    %v1215 = vrot.slane %v1214, 2
    %v1216 = vadd.f32 %v1214, %v1215
    %v1217 = vrot.slane %v1216, 1
    %v1218 = vadd.f32 %v1216, %v1217
    %v1219 = vld [vmem:[%s5] sm:$0xff]
    %v1220 = vld [vmem:[%s5 + $0x8] sm:$0xff]
    %v1221 = vld [vmem:[%s5 + $0x10] sm:$0xff]
    %v1222 = vld [vmem:[%s5 + $0x18] sm:$0xff]
    %v1223 = vld [vmem:[%s5 + $0x20] sm:$0xff]
    %v1224 = vld [vmem:[%s5 + $0x28] sm:$0xff]
    %v1225 = vld [vmem:[%s5 + $0x30] sm:$0xff]
    %v1226 = vld [vmem:[%s5 + $0x38] sm:$0xff]
    %v1229 = vsel %vm559, %v1218, %v1211
    %1238 = vrot.lane.b32.xlu0 %v1219, 15
    %v1239 = vpop.permute.xlu0 %1238
    %1240 = vrot.lane.b32.xlu0 %v1220, 15
    %v1241 = vpop.permute.xlu0 %1240
    %1242 = vrot.lane.b32.xlu0 %v1221, 15
    %v1243 = vpop.permute.xlu0 %1242
    %1244 = vrot.lane.b32.xlu0 %v1222, 15
    %v1245 = vpop.permute.xlu0 %1244
    %1246 = vrot.lane.b32.xlu0 %v1223, 15
    %v1247 = vpop.permute.xlu0 %1246
    %1248 = vrot.lane.b32.xlu0 %v1224, 15
    %v1249 = vpop.permute.xlu0 %1248
    %1250 = vrot.lane.b32.xlu0 %v1225, 15
    %v1251 = vpop.permute.xlu0 %1250
    %1252 = vrot.lane.b32.xlu0 %v1226, 15
    %v1253 = vpop.permute.xlu0 %1252
    %vm1254 = vcmask 121856
    %v1255 = vsel %vm1254, %v1239, %v1241
    %v1256 = vsel %vm1254, %v1243, %v1245
    %v1257 = vsel %vm1254, %v1247, %v1249
    %v1258 = vsel %vm1254, %v1251, %v1253
    %v1263 = vsel %vm149, %v1229, 0
    %1265 = vmatprep.subr.mxu0 0.0
    %1266 = vmatpush1.msra.mxu0 %v1255
    %1267 = vmatprep.subr.mxu0 0.0
    %1268 = vmatpush1.msra.mxu0 %v1256
    %1269 = vmatprep.subr.mxu0 0.0
    %1270 = vmatpush1.msra.mxu0 %v1257
    %1271 = vmatprep.subr.mxu0 0.0
    %1272 = vmatpush1.msra.mxu0 %v1258
    %1273 = vmatprep.subr.mxu0 0.0
    %1274 = vmatpush1.msra.mxu0 0.0
    %1275 = vmatprep.subr.mxu0 0.0
    %1276 = vmatpush1.msra.mxu0 0.0
    %1277 = vmatprep.subr.mxu0 0.0
    %1278 = vmatpush1.msra.mxu0 0.0
    %1279 = vmatprep.subr.mxu0 0.0
    %1280 = vmatpush1.msra.mxu0 0.0
    %1281 = vmatprep.subr.mxu0 0.0
    %1282 = vmatpush1.msra.mxu0 0.0
    %1283 = vmatprep.subr.mxu0 0.0
    %1284 = vmatpush1.msra.mxu0 0.0
    %1285 = vmatprep.subr.mxu0 0.0
    %1286 = vmatpush1.msra.mxu0 0.0
    %1287 = vmatprep.subr.mxu0 0.0
    %1288 = vmatpush1.msra.mxu0 0.0
    %1289 = vmatprep.subr.mxu0 0.0
    %1290 = vmatpush1.msra.mxu0 0.0
    %1291 = vmatprep.subr.mxu0 0.0
    %1292 = vmatpush1.msra.mxu0 0.0
    %1293 = vmatprep.subr.mxu0 0.0
    %1294 = vmatpush1.msra.mxu0 0.0
    %1295 = vmatprep.subr.mxu0 0.0
    %1296 = vmatpush1.msra.mxu0 0.0
    %1297 = vmatprep.subr.mxu0 0.0
    %1298 = vmatpush1.msra.mxu0 0.0
    %1299 = vmatprep.subr.mxu0 0.0
    %1300 = vmatpush1.msra.mxu0 0.0
    %1301 = vmatprep.subr.mxu0 0.0
    %1302 = vmatpush1.msra.mxu0 0.0
    %1303 = vmatprep.subr.mxu0 0.0
    %1304 = vmatpush1.msra.mxu0 0.0
    %1305 = vmatprep.subr.mxu0 0.0
    %1306 = vmatpush1.msra.mxu0 0.0
    %1307 = vmatprep.subr.mxu0 0.0
    %1308 = vmatpush1.msra.mxu0 0.0
    %1309 = vmatprep.subr.mxu0 0.0
    %1310 = vmatpush1.msra.mxu0 0.0
    %1311 = vmatprep.subr.mxu0 0.0
    %1312 = vmatpush1.msra.mxu0 0.0
    %1313 = vmatprep.subr.mxu0 0.0
    %1314 = vmatpush1.msra.mxu0 0.0
    %1315 = vmatprep.subr.mxu0 0.0
    %1316 = vmatpush1.msra.mxu0 0.0
    %1317 = vmatprep.subr.mxu0 0.0
    %1318 = vmatpush1.msra.mxu0 0.0
    %1319 = vmatprep.subr.mxu0 0.0
    %1320 = vmatpush1.msra.mxu0 0.0
    %1321 = vmatprep.subr.mxu0 0.0
    %1322 = vmatpush1.msra.mxu0 0.0
    %1323 = vmatprep.subr.mxu0 0.0
    %1324 = vmatpush1.msra.mxu0 0.0
    %1325 = vmatprep.subr.mxu0 0.0
    %1326 = vmatpush1.msra.mxu0 0.0
    %1327 = vmatprep.subr.mxu0 0.0
    %1328 = vmatpush1.msra.mxu0 0.0
    %1329 = vmatprep.mubr.f32.mxu0 0.0
    %1330 = vmatmul.mubr.f32.gmra.mrb[0].mxu0 %v1263
    %v1331 = vpop.f32.mrb[0].mxu0
    %v1332 = vadd.f32 0.0, %v1331
    %v1333 = vpop.f32.mrb[0].mxu0
    %1334 = vdwg.mxu0
    %1336 = vrot.lane.b32.xlu0 %v1332, 17
    %v1337 = vpop.permute.xlu0 %1336
    %v1339 = vadd.f32 %v1074, %v1337
    %v1340 = vtanh.pop %v1339
    %1342 = vrot.lane.b32.xlu0 %v1340, 127
    %v1343 = vpop.permute.xlu0 %1342
    %v1345 = vsel %vm69, %v1077, %v1343
    %v1346 = vld [vmem:[%s8] sm:$0xff]
    %v1347 = vld [vmem:[%s8 + $0x8] sm:$0xff]
    %v1348 = vld [vmem:[%s8 + $0x10] sm:$0xff]
    %v1349 = vld [vmem:[%s8 + $0x18] sm:$0xff]
    %v1350 = vld [vmem:[%s8 + $0x20] sm:$0xff]
    %v1351 = vld [vmem:[%s8 + $0x28] sm:$0xff]
    %v1352 = vld [vmem:[%s9 + $0x1] sm:$0x1]
    %v1354 = vlaneseq
    %v1355 = vshrl.u32 %v1354, 7
    %v1356 = vsub.s32 0, %v1355
    %v1357 = vrot.slane %v1352, %v1356
    %1358 = vrot.lane.b32.xlu0 %v1357, 78
    %v1359 = vpop.permute.xlu0 %1358
    %vm1361 = vcmask 392192
    %v1363 = vsel %vm1361, %v1345, 0
    %1365 = vmatprep.subr.mxu0 0.0
    %1366 = vmatpush1.msra.mxu0 %v1346
    %1367 = vmatprep.subr.mxu0 0.0
    %1368 = vmatpush1.msra.mxu0 %v1347
    %1369 = vmatprep.subr.mxu0 0.0
    %1370 = vmatpush1.msra.mxu0 %v1348
    %1371 = vmatprep.subr.mxu0 0.0
    %1372 = vmatpush1.msra.mxu0 %v1349
    %1373 = vmatprep.subr.mxu0 0.0
    %1374 = vmatpush1.msra.mxu0 %v1350
    %1375 = vmatprep.subr.mxu0 0.0
    %1376 = vmatpush1.msra.mxu0 %v1351
    %1377 = vmatprep.subr.mxu0 0.0
    %1378 = vmatpush1.msra.mxu0 0.0
    %1379 = vmatprep.subr.mxu0 0.0
    %1380 = vmatpush1.msra.mxu0 0.0
    %1381 = vmatprep.subr.mxu0 0.0
    %1382 = vmatpush1.msra.mxu0 0.0
    %1383 = vmatprep.subr.mxu0 0.0
    %1384 = vmatpush1.msra.mxu0 0.0
    %1385 = vmatprep.subr.mxu0 0.0
    %1386 = vmatpush1.msra.mxu0 0.0
    %1387 = vmatprep.subr.mxu0 0.0
    %1388 = vmatpush1.msra.mxu0 0.0
    %1389 = vmatprep.subr.mxu0 0.0
    %1390 = vmatpush1.msra.mxu0 0.0
    %1391 = vmatprep.subr.mxu0 0.0
    %1392 = vmatpush1.msra.mxu0 0.0
    %1393 = vmatprep.subr.mxu0 0.0
    %1394 = vmatpush1.msra.mxu0 0.0
    %1395 = vmatprep.subr.mxu0 0.0
    %1396 = vmatpush1.msra.mxu0 0.0
    %1397 = vmatprep.subr.mxu0 0.0
    %1398 = vmatpush1.msra.mxu0 0.0
    %1399 = vmatprep.subr.mxu0 0.0
    %1400 = vmatpush1.msra.mxu0 0.0
    %1401 = vmatprep.subr.mxu0 0.0
    %1402 = vmatpush1.msra.mxu0 0.0
    %1403 = vmatprep.subr.mxu0 0.0
    %1404 = vmatpush1.msra.mxu0 0.0
    %1405 = vmatprep.subr.mxu0 0.0
    %1406 = vmatpush1.msra.mxu0 0.0
    %1407 = vmatprep.subr.mxu0 0.0
    %1408 = vmatpush1.msra.mxu0 0.0
    %1409 = vmatprep.subr.mxu0 0.0
    %1410 = vmatpush1.msra.mxu0 0.0
    %1411 = vmatprep.subr.mxu0 0.0
    %1412 = vmatpush1.msra.mxu0 0.0
    %1413 = vmatprep.subr.mxu0 0.0
    %1414 = vmatpush1.msra.mxu0 0.0
    %1415 = vmatprep.subr.mxu0 0.0
    %1416 = vmatpush1.msra.mxu0 0.0
    %1417 = vmatprep.subr.mxu0 0.0
    %1418 = vmatpush1.msra.mxu0 0.0
    %1419 = vmatprep.subr.mxu0 0.0
    %1420 = vmatpush1.msra.mxu0 0.0
    %1421 = vmatprep.subr.mxu0 0.0
    %1422 = vmatpush1.msra.mxu0 0.0
    %1423 = vmatprep.subr.mxu0 0.0
    %1424 = vmatpush1.msra.mxu0 0.0
    %1425 = vmatprep.subr.mxu0 0.0
    %1426 = vmatpush1.msra.mxu0 0.0
    %1427 = vmatprep.subr.mxu0 0.0
    %1428 = vmatpush1.msra.mxu0 0.0
    %1429 = vmatprep.mubr.f32.mxu0 0.0
    %1430 = vmatmul.mubr.f32.gmra.mrb[0].mxu0 %v1363
    %v1431 = vpop.f32.mrb[0].mxu0
    %v1432 = vadd.f32 %v1359, %v1431
    %v1433 = vpop.f32.mrb[0].mxu0
    %1434 = vdwg.mxu0
    %v1435 = vxor.u32 %v1432, 2147483648
    %v1436 = vmul.f32 %v1435, 1.442695
    %v1437 = vpow.pop %v1436
    %v1438 = vadd.f32 %v1437, 1.0
    %v1439 = vrcp.pop %v1438
    %v1440 = vmul.f32 1.0, %v1439
    %v1441 = vround.ne.pseudo %v1440
    %v1442 = vround.ne.pseudo %v1083
    %1444 = vrot.lane.b32.xlu0 %v1442, 112
    %v1445 = vpop.permute.xlu0 %1444
    %1448 = vrot.lane.b32.xlu0 %v1083, 113
    %v1449 = vpop.permute.xlu0 %1448
    %1452 = vrot.lane.b32.xlu0 %v1441, 1
    %v1453 = vpop.permute.xlu0 %1452
    %1456 = vrot.lane.b32.xlu0 %v1440, 17
    %v1457 = vpop.permute.xlu0 %1456
    %v1459 = vadd.s32 %v538, 4294967262
    %v1460 = vlaneseq
    %v1461 = vshrl.u32 %v1460, 7
    %v1462 = vsub.s32 %v1459, %v1461
    %v1463 = vrot.slane %v1120, %v1462
    %v1464 = vlaneseq
    %v1465 = vshrl.u32 %v1464, 7
    %v1466 = vsub.s32 %v1459, %v1465
    %v1467 = vrot.slane %v1123, %v1466
    %v1468 = vsel %vm559, %v1467, %v1463
    %1471 = vrot.lane.b32.xlu0 %v1432, 42
    %v1472 = vpop.permute.xlu0 %1471
    %vm1474 = vcmask 7168
    %v1475 = vsel %vm1474, %v1445, %v1449
    %vm1476 = vcmask 15360
    %v1477 = vsel %vm1476, %v1475, %v1453
    %vm1478 = vcmask 146432
    %v1479 = vsel %vm1478, %v1477, %v1457
    %vm1480 = vcmask 277504
    %v1481 = vsel %vm1480, %v1479, %v1468
    %vm1482 = vcmask 343040
    %v1483 = vsel %vm1482, %v1481, %v1472
    %vm1484 = vcmask 351232
    %v1485 = vsel %vm1484, %v1483, 0.0
    %1486 = vst [vmem:[%s10] sm:$0x3] %v1485
    // Predicated region
    $region50: #{agent_forward.1} parent=1 // pred_check
      _
    $region51: #{agent_forward.1} parent=1 // pred_check_branch
      %1488 = sbr.rel (0) target = $region53
    $region52: #{agent_forward.1} parent=1 // pred_region
      _
    $region53: #{agent_forward.1} parent=1 // pred_fallthru
      _
    // Predicated region
    $region54: #{agent_forward.1} parent=1 // pred_check
      _
    $region55: #{agent_forward.1} parent=1 // pred_check_branch
      %1490 = sbr.rel (0) target = $region57
    $region56: #{agent_forward.1} parent=1 // pred_region
      _
    $region57: #{agent_forward.1} parent=1 // pred_fallthru
      _
    %1491 = vsyncpa [#allocation3], 1
    %1492 = vsyncpa [#allocation5], 1

</llo_original>
